<compile_context>
chip_gen: v7x
topology: tpu7x:2x2x1
jax: 0.10.0
libtpu: 0.0.40
codegen_flags: <defaults>
</compile_context>

<pallas_src>
import functools
import math

import jax
import jax.numpy as jnp
from jax.experimental import pallas as pl
from jax.experimental.pallas import tpu as pltpu

# ----------------------- scaled-down BERT-base config -----------------------
VOCAB = 64          # bert-base: 30522
TYPE_VOCAB = 2
MAX_POS = 32        # bert-base: 512
HIDDEN = 128        # bert-base: 768
N_HEADS = 2         # bert-base: 12
HEAD_DIM = HIDDEN // N_HEADS
N_LAYERS = 2        # bert-base: 12
INTERMEDIATE = 512  # bert-base: 3072
FC_HIDDEN = 256     # original module: 1024
NUM_CLASS = 2
LN_EPS = 1e-12      # BERT LayerNorm eps


# ------------------------------ in-kernel helpers -----------------------------
def _layernorm(x, g, b, eps):
    # f32 LayerNorm over the last (hidden) axis; rsqrt stays on the EUP path.
    mu = jnp.mean(x, axis=-1, keepdims=True)
    xc = x - mu
    var = jnp.mean(xc * xc, axis=-1, keepdims=True)
    return xc * jax.lax.rsqrt(var + eps) * g + b


def _gelu(x):
    # tanh-approx GELU in f32 (see TODO above).
    c = math.sqrt(2.0 / math.pi)
    return 0.5 * x * (1.0 + jnp.tanh(c * (x + 0.044715 * x * x * x)))


# ------------------------------- fused kernel --------------------------------
def _encoder_kernel(x_ref, m_ref, eg_ref, eb_ref,
                    wqkv_ref, bqkv_ref, wo_ref, bo_ref, ln1g_ref, ln1b_ref,
                    wi_ref, bi_ref, wf_ref, bff_ref, ln2g_ref, ln2b_ref,
                    w1_ref, b1_ref, w2_ref, b2_ref,
                    logits_ref, h_sc, *, eps):
    # Grid = (batch, layer). One batch element per step; residual stream for
    # that element is carried across the (sequential, "arbitrary") layer axis
    # in the VMEM scratch h_sc.
    layer = pl.program_id(1)
    S = x_ref.shape[1]

    # Layer 0: build the residual stream = LayerNorm(summed embeddings).
    @pl.when(layer == 0)
    def _():
        h_sc[...] = _layernorm(x_ref[0], eg_ref[...], eb_ref[...], eps)

    h = h_sc[...]                                    # [S, HIDDEN] f32

    # ---------------- attention sub-block ----------------
    # Fused QKV projection (Q softmax scale pre-folded into the weights).
    qkv = jnp.dot(h.astype(jnp.bfloat16), wqkv_ref[0],
                  preferred_element_type=jnp.float32) + bqkv_ref[0]   # [S, 3H]
    addm = jnp.broadcast_to(m_ref[0], (S, S))        # mask broadcast hoisted out of head loop
    wo = wo_ref[0]                                   # [HIDDEN, HIDDEN] bf16

    attn = jnp.zeros((S, HIDDEN), jnp.float32)
    for hd in range(N_HEADS):                        # static loop (unrolled at trace time)
        lo = hd * HEAD_DIM
        qh = qkv[:, lo:lo + HEAD_DIM].astype(jnp.bfloat16)
        kh = qkv[:, HIDDEN + lo:HIDDEN + lo + HEAD_DIM].astype(jnp.bfloat16)
        vh = qkv[:, 2 * HIDDEN + lo:2 * HIDDEN + lo + HEAD_DIM].astype(jnp.bfloat16)
        s = jax.lax.dot_general(qh, kh, (((1,), (1,)), ((), ())),
                                preferred_element_type=jnp.float32) + addm   # [S, S]
        p = jnp.exp(s - jnp.max(s, axis=-1, keepdims=True))
        p = p * pl.reciprocal(jnp.sum(p, axis=-1, keepdims=True), approx=True)  # EUP
        ctx = jnp.dot(p.astype(jnp.bfloat16), vh,
                      preferred_element_type=jnp.float32)                      # [S, D]
        # Accumulate through the output projection (no lane-axis head concat).
        attn = attn + jnp.dot(ctx.astype(jnp.bfloat16), wo[lo:lo + HEAD_DIM, :],
                              preferred_element_type=jnp.float32)
    h1 = _layernorm(attn + bo_ref[0] + h, ln1g_ref[0], ln1b_ref[0], eps)

    # ---------------- FFN sub-block ----------------
    inter = _gelu(jnp.dot(h1.astype(jnp.bfloat16), wi_ref[0],
                          preferred_element_type=jnp.float32) + bi_ref[0])     # [S, I]
    ffn = jnp.dot(inter.astype(jnp.bfloat16), wf_ref[0],
                  preferred_element_type=jnp.float32) + bff_ref[0]             # [S, H]
    h2 = _layernorm(ffn + h1, ln2g_ref[0], ln2b_ref[0], eps)
    h_sc[...] = h2                                   # carry residual to next layer

    # ---------------- classification head (CLS token) at the last layer ------
    @pl.when(layer == pl.num_programs(1) - 1)
    def _():
        cls = h2[0:1, :]                             # [1, HIDDEN] CLS row
        t = jnp.dot(cls.astype(jnp.bfloat16), w1_ref[...],
                    preferred_element_type=jnp.float32) + b1_ref[...]
        t = jnp.maximum(t, 0.0)
        logits_ref[0] = jnp.dot(t.astype(jnp.bfloat16), w2_ref[...],
                                preferred_element_type=jnp.float32) + b2_ref[...]


def bert_encoder(x_emb, addmask, params):
    B, S, H = x_emb.shape
    L = N_LAYERS
    I = INTERMEDIATE
    kernel = functools.partial(_encoder_kernel, eps=LN_EPS)

    rep = lambda b, l: (0, 0)          # weights shared by every grid step
    per_batch = lambda b, l: (b, 0, 0)  # per-batch blocks (resident across layer axis)
    per_layer = lambda b, l: (l, 0, 0)  # per-layer stacked weights

    grid_spec = pltpu.PrefetchScalarGridSpec(
        num_scalar_prefetch=0,
        grid=(B, L),
        in_specs=[
            pl.BlockSpec((1, S, H), per_batch),         # summed embeddings
            pl.BlockSpec((1, 1, S), per_batch),         # additive key mask
            pl.BlockSpec((1, H), rep),                  # emb LN gamma
            pl.BlockSpec((1, H), rep),                  # emb LN beta
            pl.BlockSpec((1, H, 3 * H), per_layer),     # wqkv (Q pre-scaled)
            pl.BlockSpec((1, 1, 3 * H), per_layer),     # bqkv
            pl.BlockSpec((1, H, H), per_layer),         # wo
            pl.BlockSpec((1, 1, H), per_layer),         # bo
            pl.BlockSpec((1, 1, H), per_layer),         # ln1 gamma
            pl.BlockSpec((1, 1, H), per_layer),         # ln1 beta
            pl.BlockSpec((1, H, I), per_layer),         # wi
            pl.BlockSpec((1, 1, I), per_layer),         # bi
            pl.BlockSpec((1, I, H), per_layer),         # wf
            pl.BlockSpec((1, 1, H), per_layer),         # bf
            pl.BlockSpec((1, 1, H), per_layer),         # ln2 gamma
            pl.BlockSpec((1, 1, H), per_layer),         # ln2 beta
            pl.BlockSpec((H, FC_HIDDEN), rep),          # fc1 weight
            pl.BlockSpec((1, FC_HIDDEN), rep),          # fc1 bias
            pl.BlockSpec((FC_HIDDEN, NUM_CLASS), rep),  # fc2 weight
            pl.BlockSpec((1, NUM_CLASS), rep),          # fc2 bias
        ],
        out_specs=pl.BlockSpec((1, 1, NUM_CLASS), per_batch),
        scratch_shapes=[pltpu.VMEM((S, H), jnp.float32)],   # residual-stream carry
    )

    logits = pl.pallas_call(
        kernel,
        out_shape=jax.ShapeDtypeStruct((B, 1, NUM_CLASS), jnp.float32),
        grid_spec=grid_spec,
        compiler_params=pltpu.CompilerParams(
            dimension_semantics=("parallel", "arbitrary")),
    )(x_emb, addmask,
      params["emb_ln_g"], params["emb_ln_b"],
      params["wqkv"], params["bqkv"], params["wo"], params["bo"],
      params["ln1_g"], params["ln1_b"],
      params["wi"], params["bi"], params["wf"], params["bf"],
      params["ln2_g"], params["ln2_b"],
      params["fc1_w"], params["fc1_b"], params["fc2_w"], params["fc2_b"])
    return logits.reshape(B, NUM_CLASS)


# ------------------------------- model forward -------------------------------
def bert_base_forward(params, input_ids, token_type_ids, attention_mask):
    B, S = input_ids.shape
    # Embedding gathers are JAX glue; everything else runs in ONE Pallas kernel.
    emb = (params["word_emb"][input_ids]
           + params["pos_emb"][jnp.arange(S)][None, :, :]
           + params["type_emb"][token_type_ids]).astype(jnp.float32)
    # additive key mask: 0 where keep, -1e9 where pad
    addmask = ((1.0 - attention_mask.astype(jnp.float32)) * (-1e9)).reshape(B, 1, S)
    return bert_base_logits(params, emb, addmask)


def bert_base_logits(params, emb, addmask):
    return bert_encoder(emb, addmask, params)


# --------------------------- deterministic weights ---------------------------
def init_params(seed=0):
    keys = iter(jax.random.split(jax.random.PRNGKey(seed), 32))

    def nrm(shape, scale=0.02):
        return scale * jax.random.normal(next(keys), shape, jnp.float32)

    bf16 = jnp.bfloat16
    q_scale = 1.0 / math.sqrt(HEAD_DIM)

    # Fused [q | k | v] projection, stacked over layers; the 1/sqrt(head_dim)
    # softmax scale is folded into the Q columns (and would be folded into the
    # Q bias too if it were nonzero), so the kernel never multiplies by it.
    wqkv = nrm((N_LAYERS, HIDDEN, 3 * HIDDEN))
    wqkv = wqkv.at[:, :, :HIDDEN].multiply(q_scale)

    return {
        "word_emb": nrm((VOCAB, HIDDEN)),
        "pos_emb": nrm((MAX_POS, HIDDEN)),
        "type_emb": nrm((TYPE_VOCAB, HIDDEN)),
        "emb_ln_g": jnp.ones((1, HIDDEN), jnp.float32),
        "emb_ln_b": jnp.zeros((1, HIDDEN), jnp.float32),
        "wqkv": wqkv.astype(bf16),
        "bqkv": jnp.zeros((N_LAYERS, 1, 3 * HIDDEN), jnp.float32),
        "wo": nrm((N_LAYERS, HIDDEN, HIDDEN)).astype(bf16),
        "bo": jnp.zeros((N_LAYERS, 1, HIDDEN), jnp.float32),
        "ln1_g": jnp.ones((N_LAYERS, 1, HIDDEN), jnp.float32),
        "ln1_b": jnp.zeros((N_LAYERS, 1, HIDDEN), jnp.float32),
        "wi": nrm((N_LAYERS, HIDDEN, INTERMEDIATE)).astype(bf16),
        "bi": jnp.zeros((N_LAYERS, 1, INTERMEDIATE), jnp.float32),
        "wf": nrm((N_LAYERS, INTERMEDIATE, HIDDEN)).astype(bf16),
        "bf": jnp.zeros((N_LAYERS, 1, HIDDEN), jnp.float32),
        "ln2_g": jnp.ones((N_LAYERS, 1, HIDDEN), jnp.float32),
        "ln2_b": jnp.zeros((N_LAYERS, 1, HIDDEN), jnp.float32),
        "fc1_w": nrm((HIDDEN, FC_HIDDEN)).astype(bf16),
        "fc1_b": jnp.zeros((1, FC_HIDDEN), jnp.float32),
        "fc2_w": nrm((FC_HIDDEN, NUM_CLASS)).astype(bf16),
        "fc2_b": jnp.zeros((1, NUM_CLASS), jnp.float32),
    }


# ------------------------------------ main ------------------------------------
if __name__ == "__main__":
    B, S = 2, 16
    key = jax.random.PRNGKey(0)
    k_ids, _ = jax.random.split(key)
    input_ids = jax.random.randint(k_ids, (B, S), 0, VOCAB, dtype=jnp.int32)
    token_type_ids = jnp.zeros((B, S), jnp.int32)
    attention_mask = jnp.ones((B, S), jnp.int32)

    params = init_params(seed=0)

    fwd = jax.jit(functools.partial(bert_base_forward, params))
    logits = fwd(input_ids, token_type_ids, attention_mask)
    jax.block_until_ready(logits)

    assert logits.shape == (B, NUM_CLASS), logits.shape
    assert logits.dtype == jnp.float32
    assert bool(jnp.all(jnp.isfinite(logits)))
    print("KERNEL_OK")
</pallas_src>

<mosaic_0001>
module attributes {stable_mosaic.version = 11 : i64} {
  func.func @_encoder_kernel(%arg0: i32, %arg1: i32, %arg2: memref<1x16x128xf32, #tpu.memory_space<vmem>>, %arg3: memref<1x1x16xf32, #tpu.memory_space<vmem>>, %arg4: memref<1x128xf32, #tpu.memory_space<vmem>>, %arg5: memref<1x128xf32, #tpu.memory_space<vmem>>, %arg6: memref<1x128x384xbf16, #tpu.memory_space<vmem>>, %arg7: memref<1x1x384xf32, #tpu.memory_space<vmem>>, %arg8: memref<1x128x128xbf16, #tpu.memory_space<vmem>>, %arg9: memref<1x1x128xf32, #tpu.memory_space<vmem>>, %arg10: memref<1x1x128xf32, #tpu.memory_space<vmem>>, %arg11: memref<1x1x128xf32, #tpu.memory_space<vmem>>, %arg12: memref<1x128x512xbf16, #tpu.memory_space<vmem>>, %arg13: memref<1x1x512xf32, #tpu.memory_space<vmem>>, %arg14: memref<1x512x128xbf16, #tpu.memory_space<vmem>>, %arg15: memref<1x1x128xf32, #tpu.memory_space<vmem>>, %arg16: memref<1x1x128xf32, #tpu.memory_space<vmem>>, %arg17: memref<1x1x128xf32, #tpu.memory_space<vmem>>, %arg18: memref<128x256xbf16, #tpu.memory_space<vmem>>, %arg19: memref<1x256xf32, #tpu.memory_space<vmem>>, %arg20: memref<256x2xbf16, #tpu.memory_space<vmem>>, %arg21: memref<1x2xf32, #tpu.memory_space<vmem>>, %arg22: memref<1x1x2xf32, #tpu.memory_space<vmem>>, %arg23: memref<16x128xf32, #tpu.memory_space<vmem>>) attributes {dimension_semantics = [#tpu.dimension_semantics<parallel>, #tpu.dimension_semantics<arbitrary>], iteration_bounds = array<i64: 2, 2>, scalar_prefetch = 0 : i64, scratch_operands = 1 : i64, tpu.core_type = #tpu.core_type<tc>, window_params = [{transform_indices = @transform_0, window_bounds = array<i64: 1, 16, 128>}, {transform_indices = @transform_1, window_bounds = array<i64: 1, 1, 16>}, {pipeline_mode = #tpu.pipeline_mode<synchronous>, transform_indices = @transform_2, window_bounds = array<i64: 1, 128>}, {pipeline_mode = #tpu.pipeline_mode<synchronous>, transform_indices = @transform_3, window_bounds = array<i64: 1, 128>}, {transform_indices = @transform_4, window_bounds = array<i64: 1, 128, 384>}, {transform_indices = @transform_5, window_bounds = array<i64: 1, 1, 384>}, {transform_indices = @transform_6, window_bounds = array<i64: 1, 128, 128>}, {transform_indices = @transform_7, window_bounds = array<i64: 1, 1, 128>}, {transform_indices = @transform_8, window_bounds = array<i64: 1, 1, 128>}, {transform_indices = @transform_9, window_bounds = array<i64: 1, 1, 128>}, {transform_indices = @transform_10, window_bounds = array<i64: 1, 128, 512>}, {transform_indices = @transform_11, window_bounds = array<i64: 1, 1, 512>}, {transform_indices = @transform_12, window_bounds = array<i64: 1, 512, 128>}, {transform_indices = @transform_13, window_bounds = array<i64: 1, 1, 128>}, {transform_indices = @transform_14, window_bounds = array<i64: 1, 1, 128>}, {transform_indices = @transform_15, window_bounds = array<i64: 1, 1, 128>}, {pipeline_mode = #tpu.pipeline_mode<synchronous>, transform_indices = @transform_16, window_bounds = array<i64: 128, 256>}, {pipeline_mode = #tpu.pipeline_mode<synchronous>, transform_indices = @transform_17, window_bounds = array<i64: 1, 256>}, {pipeline_mode = #tpu.pipeline_mode<synchronous>, transform_indices = @transform_18, window_bounds = array<i64: 256, 2>}, {pipeline_mode = #tpu.pipeline_mode<synchronous>, transform_indices = @transform_19, window_bounds = array<i64: 1, 2>}, {transform_indices = @transform_20, window_bounds = array<i64: 1, 1, 2>}]} {
    %c0_i32 = arith.constant 0 : i32
    %0 = arith.cmpi eq, %arg1, %c0_i32 : i32
    %1 = arith.extui %0 : i1 to i32
    %c0_i32_0 = arith.constant 0 : i32
    %2 = arith.cmpi ne, %1, %c0_i32_0 : i32
    scf.if %2 {
      %c0_71 = arith.constant 0 : index
      %c0_72 = arith.constant 0 : index
      %c0_73 = arith.constant 0 : index
      %154 = vector.load %arg2[%c0_71, %c0_72, %c0_73] : memref<1x16x128xf32, #tpu.memory_space<vmem>>, vector<1x16x128xf32>
      %155 = vector.shape_cast %154 : vector<1x16x128xf32> to vector<16x128xf32>
      %c0_74 = arith.constant 0 : index
      %c0_75 = arith.constant 0 : index
      %156 = vector.load %arg4[%c0_74, %c0_75] : memref<1x128xf32, #tpu.memory_space<vmem>>, vector<1x128xf32>
      %c0_76 = arith.constant 0 : index
      %c0_77 = arith.constant 0 : index
      %157 = vector.load %arg5[%c0_76, %c0_77] : memref<1x128xf32, #tpu.memory_space<vmem>>, vector<1x128xf32>
      %cst_78 = arith.constant dense<0.000000e+00> : vector<16xf32>
      %158 = vector.multi_reduction <add>, %155, %cst_78 [1] : vector<16x128xf32> to vector<16xf32>
      %159 = vector.shape_cast %158 : vector<16xf32> to vector<16x1xf32>
      %cst_79 = arith.constant 1.280000e+02 : f32
      %160 = vector.broadcast %cst_79 : f32 to vector<16x1xf32>
      %161 = arith.divf %159, %160 : vector<16x1xf32>
      %162 = vector.broadcast %161 : vector<16x1xf32> to vector<16x128xf32>
      %163 = arith.subf %155, %162 : vector<16x128xf32>
      %164 = arith.mulf %163, %163 : vector<16x128xf32>
      %cst_80 = arith.constant dense<0.000000e+00> : vector<16xf32>
      %165 = vector.multi_reduction <add>, %164, %cst_80 [1] : vector<16x128xf32> to vector<16xf32>
      %166 = vector.shape_cast %165 : vector<16xf32> to vector<16x1xf32>
      %cst_81 = arith.constant 1.280000e+02 : f32
      %167 = vector.broadcast %cst_81 : f32 to vector<16x1xf32>
      %168 = arith.divf %166, %167 : vector<16x1xf32>
      %cst_82 = arith.constant 9.99999996E-13 : f32
      %169 = vector.broadcast %cst_82 : f32 to vector<16x1xf32>
      %170 = arith.addf %168, %169 : vector<16x1xf32>
      %171 = math.rsqrt %170 : vector<16x1xf32>
      %172 = vector.broadcast %171 : vector<16x1xf32> to vector<16x128xf32>
      %173 = arith.mulf %163, %172 : vector<16x128xf32>
      %174 = vector.broadcast %156 : vector<1x128xf32> to vector<16x128xf32>
      %175 = arith.mulf %173, %174 : vector<16x128xf32>
      %176 = vector.broadcast %157 : vector<1x128xf32> to vector<16x128xf32>
      %177 = arith.addf %175, %176 : vector<16x128xf32>
      %c0_83 = arith.constant 0 : index
      %c0_84 = arith.constant 0 : index
      %178 = vector.load %arg23[%c0_83, %c0_84] : memref<16x128xf32, #tpu.memory_space<vmem>>, vector<16x128xf32>
      tpu.vector_store %arg23[%c0_83, %c0_84], %177 {strides = array<i32>} : memref<16x128xf32, #tpu.memory_space<vmem>>, vector<16x128xf32>,
    } else {
    }
    %c0 = arith.constant 0 : index
    %c0_1 = arith.constant 0 : index
    %3 = vector.load %arg23[%c0, %c0_1] : memref<16x128xf32, #tpu.memory_space<vmem>>, vector<16x128xf32>
    %4 = arith.truncf %3 : vector<16x128xf32> to vector<16x128xbf16>
    %c0_2 = arith.constant 0 : index
    %c0_3 = arith.constant 0 : index
    %c0_4 = arith.constant 0 : index
    %5 = vector.load %arg6[%c0_2, %c0_3, %c0_4] : memref<1x128x384xbf16, #tpu.memory_space<vmem>>, vector<1x128x384xbf16>
    %6 = vector.shape_cast %5 : vector<1x128x384xbf16> to vector<128x384xbf16>
    %cst = arith.constant dense<0.000000e+00> : vector<16x384xf32>
    %7 = tpu.matmul %4, %6, %cst {dimension_numbers = #tpu.dot_dimension_numbers<[1], [0], [0], [1], [0, 0, 1, 1], [], []>} : vector<16x128xbf16>, vector<128x384xbf16>, vector<16x384xf32> -> vector<16x384xf32>
    %c0_5 = arith.constant 0 : index
    %c0_6 = arith.constant 0 : index
    %c0_7 = arith.constant 0 : index
    %8 = vector.load %arg7[%c0_5, %c0_6, %c0_7] : memref<1x1x384xf32, #tpu.memory_space<vmem>>, vector<1x1x384xf32>
    %9 = vector.shape_cast %8 : vector<1x1x384xf32> to vector<1x384xf32>
    %10 = vector.broadcast %9 : vector<1x384xf32> to vector<16x384xf32>
    %11 = arith.addf %7, %10 : vector<16x384xf32>
    %c0_8 = arith.constant 0 : index
    %c0_9 = arith.constant 0 : index
    %c0_10 = arith.constant 0 : index
    %12 = vector.load %arg3[%c0_8, %c0_9, %c0_10] : memref<1x1x16xf32, #tpu.memory_space<vmem>>, vector<1x1x16xf32>
    %13 = vector.shape_cast %12 : vector<1x1x16xf32> to vector<1x16xf32>
    %14 = vector.shape_cast %13 : vector<1x16xf32> to vector<1x16xf32>
    %15 = vector.broadcast %14 : vector<1x16xf32> to vector<16x16xf32>
    %c0_11 = arith.constant 0 : index
    %c0_12 = arith.constant 0 : index
    %c0_13 = arith.constant 0 : index
    %16 = vector.load %arg8[%c0_11, %c0_12, %c0_13] : memref<1x128x128xbf16, #tpu.memory_space<vmem>>, vector<1x128x128xbf16>
    %17 = vector.shape_cast %16 : vector<1x128x128xbf16> to vector<128x128xbf16>
    %cst_14 = arith.constant 0.000000e+00 : f32
    %18 = vector.broadcast %cst_14 : f32 to vector<16x128xf32>
    %19 = vector.extract_strided_slice %11 {offsets = [0, 0], sizes = [16, 64], strides = [1, 1]} : vector<16x384xf32> to vector<16x64xf32>
    %20 = arith.truncf %19 : vector<16x64xf32> to vector<16x64xbf16>
    %21 = vector.extract_strided_slice %11 {offsets = [0, 128], sizes = [16, 64], strides = [1, 1]} : vector<16x384xf32> to vector<16x64xf32>
    %22 = arith.truncf %21 : vector<16x64xf32> to vector<16x64xbf16>
    %23 = vector.extract_strided_slice %11 {offsets = [0, 256], sizes = [16, 64], strides = [1, 1]} : vector<16x384xf32> to vector<16x64xf32>
    %24 = arith.truncf %23 : vector<16x64xf32> to vector<16x64xbf16>
    %cst_15 = arith.constant dense<0.000000e+00> : vector<16x16xf32>
    %25 = tpu.matmul %20, %22, %cst_15 {dimension_numbers = #tpu.dot_dimension_numbers<[1], [1], [0], [0], [0, 0, 1, 0], [], []>} : vector<16x64xbf16>, vector<16x64xbf16>, vector<16x16xf32> -> vector<16x16xf32>
    %26 = arith.addf %25, %15 : vector<16x16xf32>
    %cst_16 = arith.constant dense<0xFF800000> : vector<16xf32>
    %27 = vector.multi_reduction <maximumf>, %26, %cst_16 [1] : vector<16x16xf32> to vector<16xf32>
    %28 = vector.shape_cast %27 : vector<16xf32> to vector<16x1xf32>
    %29 = vector.broadcast %28 : vector<16x1xf32> to vector<16x16xf32>
    %30 = arith.subf %26, %29 : vector<16x16xf32>
    %31 = math.exp %30 : vector<16x16xf32>
    %cst_17 = arith.constant dense<0.000000e+00> : vector<16xf32>
    %32 = vector.multi_reduction <add>, %31, %cst_17 [1] : vector<16x16xf32> to vector<16xf32>
    %33 = vector.shape_cast %32 : vector<16xf32> to vector<16x1xf32>
    %34 = tpu.reciprocal %33 {approx = true} : vector<16x1xf32> -> vector<16x1xf32>
    %35 = vector.broadcast %34 : vector<16x1xf32> to vector<16x16xf32>
    %36 = arith.mulf %31, %35 : vector<16x16xf32>
    %37 = arith.truncf %36 : vector<16x16xf32> to vector<16x16xbf16>
    %cst_18 = arith.constant dense<0.000000e+00> : vector<16x64xf32>
    %38 = tpu.matmul %37, %24, %cst_18 {dimension_numbers = #tpu.dot_dimension_numbers<[1], [0], [0], [1], [0, 0, 1, 1], [], []>} : vector<16x16xbf16>, vector<16x64xbf16>, vector<16x64xf32> -> vector<16x64xf32>
    %39 = arith.truncf %38 : vector<16x64xf32> to vector<16x64xbf16>
    %40 = vector.extract_strided_slice %17 {offsets = [0, 0], sizes = [64, 128], strides = [1, 1]} : vector<128x128xbf16> to vector<64x128xbf16>
    %cst_19 = arith.constant dense<0.000000e+00> : vector<16x128xf32>
    %41 = tpu.matmul %39, %40, %cst_19 {dimension_numbers = #tpu.dot_dimension_numbers<[1], [0], [0], [1], [0, 0, 1, 1], [], []>} : vector<16x64xbf16>, vector<64x128xbf16>, vector<16x128xf32> -> vector<16x128xf32>
    %42 = arith.addf %18, %41 : vector<16x128xf32>
    %43 = vector.extract_strided_slice %11 {offsets = [0, 64], sizes = [16, 64], strides = [1, 1]} : vector<16x384xf32> to vector<16x64xf32>
    %44 = arith.truncf %43 : vector<16x64xf32> to vector<16x64xbf16>
    %45 = vector.extract_strided_slice %11 {offsets = [0, 192], sizes = [16, 64], strides = [1, 1]} : vector<16x384xf32> to vector<16x64xf32>
    %46 = arith.truncf %45 : vector<16x64xf32> to vector<16x64xbf16>
    %47 = vector.extract_strided_slice %11 {offsets = [0, 320], sizes = [16, 64], strides = [1, 1]} : vector<16x384xf32> to vector<16x64xf32>
    %48 = arith.truncf %47 : vector<16x64xf32> to vector<16x64xbf16>
    %cst_20 = arith.constant dense<0.000000e+00> : vector<16x16xf32>
    %49 = tpu.matmul %44, %46, %cst_20 {dimension_numbers = #tpu.dot_dimension_numbers<[1], [1], [0], [0], [0, 0, 1, 0], [], []>} : vector<16x64xbf16>, vector<16x64xbf16>, vector<16x16xf32> -> vector<16x16xf32>
    %50 = arith.addf %49, %15 : vector<16x16xf32>
    %cst_21 = arith.constant dense<0xFF800000> : vector<16xf32>
    %51 = vector.multi_reduction <maximumf>, %50, %cst_21 [1] : vector<16x16xf32> to vector<16xf32>
    %52 = vector.shape_cast %51 : vector<16xf32> to vector<16x1xf32>
    %53 = vector.broadcast %52 : vector<16x1xf32> to vector<16x16xf32>
    %54 = arith.subf %50, %53 : vector<16x16xf32>
    %55 = math.exp %54 : vector<16x16xf32>
    %cst_22 = arith.constant dense<0.000000e+00> : vector<16xf32>
    %56 = vector.multi_reduction <add>, %55, %cst_22 [1] : vector<16x16xf32> to vector<16xf32>
    %57 = vector.shape_cast %56 : vector<16xf32> to vector<16x1xf32>
    %58 = tpu.reciprocal %57 {approx = true} : vector<16x1xf32> -> vector<16x1xf32>
    %59 = vector.broadcast %58 : vector<16x1xf32> to vector<16x16xf32>
    %60 = arith.mulf %55, %59 : vector<16x16xf32>
    %61 = arith.truncf %60 : vector<16x16xf32> to vector<16x16xbf16>
    %cst_23 = arith.constant dense<0.000000e+00> : vector<16x64xf32>
    %62 = tpu.matmul %61, %48, %cst_23 {dimension_numbers = #tpu.dot_dimension_numbers<[1], [0], [0], [1], [0, 0, 1, 1], [], []>} : vector<16x16xbf16>, vector<16x64xbf16>, vector<16x64xf32> -> vector<16x64xf32>
    %63 = arith.truncf %62 : vector<16x64xf32> to vector<16x64xbf16>
    %64 = vector.extract_strided_slice %17 {offsets = [64, 0], sizes = [64, 128], strides = [1, 1]} : vector<128x128xbf16> to vector<64x128xbf16>
    %cst_24 = arith.constant dense<0.000000e+00> : vector<16x128xf32>
    %65 = tpu.matmul %63, %64, %cst_24 {dimension_numbers = #tpu.dot_dimension_numbers<[1], [0], [0], [1], [0, 0, 1, 1], [], []>} : vector<16x64xbf16>, vector<64x128xbf16>, vector<16x128xf32> -> vector<16x128xf32>
    %66 = arith.addf %42, %65 : vector<16x128xf32>
    %c0_25 = arith.constant 0 : index
    %c0_26 = arith.constant 0 : index
    %c0_27 = arith.constant 0 : index
    %67 = vector.load %arg9[%c0_25, %c0_26, %c0_27] : memref<1x1x128xf32, #tpu.memory_space<vmem>>, vector<1x1x128xf32>
    %68 = vector.shape_cast %67 : vector<1x1x128xf32> to vector<1x128xf32>
    %69 = vector.broadcast %68 : vector<1x128xf32> to vector<16x128xf32>
    %70 = arith.addf %66, %69 : vector<16x128xf32>
    %71 = arith.addf %70, %3 : vector<16x128xf32>
    %c0_28 = arith.constant 0 : index
    %c0_29 = arith.constant 0 : index
    %c0_30 = arith.constant 0 : index
    %72 = vector.load %arg10[%c0_28, %c0_29, %c0_30] : memref<1x1x128xf32, #tpu.memory_space<vmem>>, vector<1x1x128xf32>
    %73 = vector.shape_cast %72 : vector<1x1x128xf32> to vector<1x128xf32>
    %c0_31 = arith.constant 0 : index
    %c0_32 = arith.constant 0 : index
    %c0_33 = arith.constant 0 : index
    %74 = vector.load %arg11[%c0_31, %c0_32, %c0_33] : memref<1x1x128xf32, #tpu.memory_space<vmem>>, vector<1x1x128xf32>
    %75 = vector.shape_cast %74 : vector<1x1x128xf32> to vector<1x128xf32>
    %cst_34 = arith.constant dense<0.000000e+00> : vector<16xf32>
    %76 = vector.multi_reduction <add>, %71, %cst_34 [1] : vector<16x128xf32> to vector<16xf32>
    %77 = vector.shape_cast %76 : vector<16xf32> to vector<16x1xf32>
    %cst_35 = arith.constant 1.280000e+02 : f32
    %78 = vector.broadcast %cst_35 : f32 to vector<16x1xf32>
    %79 = arith.divf %77, %78 : vector<16x1xf32>
    %80 = vector.broadcast %79 : vector<16x1xf32> to vector<16x128xf32>
    %81 = arith.subf %71, %80 : vector<16x128xf32>
    %82 = arith.mulf %81, %81 : vector<16x128xf32>
    %cst_36 = arith.constant dense<0.000000e+00> : vector<16xf32>
    %83 = vector.multi_reduction <add>, %82, %cst_36 [1] : vector<16x128xf32> to vector<16xf32>
    %84 = vector.shape_cast %83 : vector<16xf32> to vector<16x1xf32>
    %cst_37 = arith.constant 1.280000e+02 : f32
    %85 = vector.broadcast %cst_37 : f32 to vector<16x1xf32>
    %86 = arith.divf %84, %85 : vector<16x1xf32>
    %cst_38 = arith.constant 9.99999996E-13 : f32
    %87 = vector.broadcast %cst_38 : f32 to vector<16x1xf32>
    %88 = arith.addf %86, %87 : vector<16x1xf32>
    %89 = math.rsqrt %88 : vector<16x1xf32>
    %90 = vector.broadcast %89 : vector<16x1xf32> to vector<16x128xf32>
    %91 = arith.mulf %81, %90 : vector<16x128xf32>
    %92 = vector.broadcast %73 : vector<1x128xf32> to vector<16x128xf32>
    %93 = arith.mulf %91, %92 : vector<16x128xf32>
    %94 = vector.broadcast %75 : vector<1x128xf32> to vector<16x128xf32>
    %95 = arith.addf %93, %94 : vector<16x128xf32>
    %96 = arith.truncf %95 : vector<16x128xf32> to vector<16x128xbf16>
    %c0_39 = arith.constant 0 : index
    %c0_40 = arith.constant 0 : index
    %c0_41 = arith.constant 0 : index
    %97 = vector.load %arg12[%c0_39, %c0_40, %c0_41] : memref<1x128x512xbf16, #tpu.memory_space<vmem>>, vector<1x128x512xbf16>
    %98 = vector.shape_cast %97 : vector<1x128x512xbf16> to vector<128x512xbf16>
    %cst_42 = arith.constant dense<0.000000e+00> : vector<16x512xf32>
    %99 = tpu.matmul %96, %98, %cst_42 {dimension_numbers = #tpu.dot_dimension_numbers<[1], [0], [0], [1], [0, 0, 1, 1], [], []>} : vector<16x128xbf16>, vector<128x512xbf16>, vector<16x512xf32> -> vector<16x512xf32>
    %c0_43 = arith.constant 0 : index
    %c0_44 = arith.constant 0 : index
    %c0_45 = arith.constant 0 : index
    %100 = vector.load %arg13[%c0_43, %c0_44, %c0_45] : memref<1x1x512xf32, #tpu.memory_space<vmem>>, vector<1x1x512xf32>
    %101 = vector.shape_cast %100 : vector<1x1x512xf32> to vector<1x512xf32>
    %102 = vector.broadcast %101 : vector<1x512xf32> to vector<16x512xf32>
    %103 = arith.addf %99, %102 : vector<16x512xf32>
    %cst_46 = arith.constant 5.000000e-01 : f32
    %104 = vector.broadcast %cst_46 : f32 to vector<16x512xf32>
    %105 = arith.mulf %104, %103 : vector<16x512xf32>
    %cst_47 = arith.constant 4.471500e-02 : f32
    %106 = vector.broadcast %cst_47 : f32 to vector<16x512xf32>
    %107 = arith.mulf %106, %103 : vector<16x512xf32>
    %108 = arith.mulf %107, %103 : vector<16x512xf32>
    %109 = arith.mulf %108, %103 : vector<16x512xf32>
    %110 = arith.addf %103, %109 : vector<16x512xf32>
    %cst_48 = arith.constant 0.797884583 : f32
    %111 = vector.broadcast %cst_48 : f32 to vector<16x512xf32>
    %112 = arith.mulf %111, %110 : vector<16x512xf32>
    %113 = math.tanh %112 : vector<16x512xf32>
    %cst_49 = arith.constant 1.000000e+00 : f32
    %114 = vector.broadcast %cst_49 : f32 to vector<16x512xf32>
    %115 = arith.addf %114, %113 : vector<16x512xf32>
    %116 = arith.mulf %105, %115 : vector<16x512xf32>
    %117 = arith.truncf %116 : vector<16x512xf32> to vector<16x512xbf16>
    %c0_50 = arith.constant 0 : index
    %c0_51 = arith.constant 0 : index
    %c0_52 = arith.constant 0 : index
    %118 = vector.load %arg14[%c0_50, %c0_51, %c0_52] : memref<1x512x128xbf16, #tpu.memory_space<vmem>>, vector<1x512x128xbf16>
    %119 = vector.shape_cast %118 : vector<1x512x128xbf16> to vector<512x128xbf16>
    %cst_53 = arith.constant dense<0.000000e+00> : vector<16x128xf32>
    %120 = tpu.matmul %117, %119, %cst_53 {dimension_numbers = #tpu.dot_dimension_numbers<[1], [0], [0], [1], [0, 0, 1, 1], [], []>} : vector<16x512xbf16>, vector<512x128xbf16>, vector<16x128xf32> -> vector<16x128xf32>
    %c0_54 = arith.constant 0 : index
    %c0_55 = arith.constant 0 : index
    %c0_56 = arith.constant 0 : index
    %121 = vector.load %arg15[%c0_54, %c0_55, %c0_56] : memref<1x1x128xf32, #tpu.memory_space<vmem>>, vector<1x1x128xf32>
    %122 = vector.shape_cast %121 : vector<1x1x128xf32> to vector<1x128xf32>
    %123 = vector.broadcast %122 : vector<1x128xf32> to vector<16x128xf32>
    %124 = arith.addf %120, %123 : vector<16x128xf32>
    %125 = arith.addf %124, %95 : vector<16x128xf32>
    %c0_57 = arith.constant 0 : index
    %c0_58 = arith.constant 0 : index
    %c0_59 = arith.constant 0 : index
    %126 = vector.load %arg16[%c0_57, %c0_58, %c0_59] : memref<1x1x128xf32, #tpu.memory_space<vmem>>, vector<1x1x128xf32>
    %127 = vector.shape_cast %126 : vector<1x1x128xf32> to vector<1x128xf32>
    %c0_60 = arith.constant 0 : index
    %c0_61 = arith.constant 0 : index
    %c0_62 = arith.constant 0 : index
    %128 = vector.load %arg17[%c0_60, %c0_61, %c0_62] : memref<1x1x128xf32, #tpu.memory_space<vmem>>, vector<1x1x128xf32>
    %129 = vector.shape_cast %128 : vector<1x1x128xf32> to vector<1x128xf32>
    %cst_63 = arith.constant dense<0.000000e+00> : vector<16xf32>
    %130 = vector.multi_reduction <add>, %125, %cst_63 [1] : vector<16x128xf32> to vector<16xf32>
    %131 = vector.shape_cast %130 : vector<16xf32> to vector<16x1xf32>
    %cst_64 = arith.constant 1.280000e+02 : f32
    %132 = vector.broadcast %cst_64 : f32 to vector<16x1xf32>
    %133 = arith.divf %131, %132 : vector<16x1xf32>
    %134 = vector.broadcast %133 : vector<16x1xf32> to vector<16x128xf32>
    %135 = arith.subf %125, %134 : vector<16x128xf32>
    %136 = arith.mulf %135, %135 : vector<16x128xf32>
    %cst_65 = arith.constant dense<0.000000e+00> : vector<16xf32>
    %137 = vector.multi_reduction <add>, %136, %cst_65 [1] : vector<16x128xf32> to vector<16xf32>
    %138 = vector.shape_cast %137 : vector<16xf32> to vector<16x1xf32>
    %cst_66 = arith.constant 1.280000e+02 : f32
    %139 = vector.broadcast %cst_66 : f32 to vector<16x1xf32>
    %140 = arith.divf %138, %139 : vector<16x1xf32>
    %cst_67 = arith.constant 9.99999996E-13 : f32
    %141 = vector.broadcast %cst_67 : f32 to vector<16x1xf32>
    %142 = arith.addf %140, %141 : vector<16x1xf32>
    %143 = math.rsqrt %142 : vector<16x1xf32>
    %144 = vector.broadcast %143 : vector<16x1xf32> to vector<16x128xf32>
    %145 = arith.mulf %135, %144 : vector<16x128xf32>
    %146 = vector.broadcast %127 : vector<1x128xf32> to vector<16x128xf32>
    %147 = arith.mulf %145, %146 : vector<16x128xf32>
    %148 = vector.broadcast %129 : vector<1x128xf32> to vector<16x128xf32>
    %149 = arith.addf %147, %148 : vector<16x128xf32>
    %c0_68 = arith.constant 0 : index
    %c0_69 = arith.constant 0 : index
    %150 = vector.load %arg23[%c0_68, %c0_69] : memref<16x128xf32, #tpu.memory_space<vmem>>, vector<16x128xf32>
    tpu.vector_store %arg23[%c0_68, %c0_69], %149 {strides = array<i32>} : memref<16x128xf32, #tpu.memory_space<vmem>>, vector<16x128xf32>,
    %c1_i32 = arith.constant 1 : i32
    %151 = arith.cmpi eq, %arg1, %c1_i32 : i32
    %152 = arith.extui %151 : i1 to i32
    %c0_i32_70 = arith.constant 0 : i32
    %153 = arith.cmpi ne, %152, %c0_i32_70 : i32
    scf.if %153 {
      %154 = vector.extract_strided_slice %149 {offsets = [0, 0], sizes = [1, 128], strides = [1, 1]} : vector<16x128xf32> to vector<1x128xf32>
      %155 = arith.truncf %154 : vector<1x128xf32> to vector<1x128xbf16>
      %c0_71 = arith.constant 0 : index
      %c0_72 = arith.constant 0 : index
      %156 = vector.load %arg18[%c0_71, %c0_72] : memref<128x256xbf16, #tpu.memory_space<vmem>>, vector<128x256xbf16>
      %cst_73 = arith.constant dense<0.000000e+00> : vector<1x256xf32>
      %157 = tpu.matmul %155, %156, %cst_73 {dimension_numbers = #tpu.dot_dimension_numbers<[1], [0], [0], [1], [0, 0, 1, 1], [], []>} : vector<1x128xbf16>, vector<128x256xbf16>, vector<1x256xf32> -> vector<1x256xf32>
      %c0_74 = arith.constant 0 : index
      %c0_75 = arith.constant 0 : index
      %158 = vector.load %arg19[%c0_74, %c0_75] : memref<1x256xf32, #tpu.memory_space<vmem>>, vector<1x256xf32>
      %159 = arith.addf %157, %158 : vector<1x256xf32>
      %cst_76 = arith.constant 0.000000e+00 : f32
      %160 = vector.broadcast %cst_76 : f32 to vector<1x256xf32>
      %161 = arith.maximumf %159, %160 : vector<1x256xf32>
      %162 = arith.truncf %161 : vector<1x256xf32> to vector<1x256xbf16>
      %c0_77 = arith.constant 0 : index
      %c0_78 = arith.constant 0 : index
      %163 = vector.load %arg20[%c0_77, %c0_78] : memref<256x2xbf16, #tpu.memory_space<vmem>>, vector<256x2xbf16>
      %cst_79 = arith.constant dense<0.000000e+00> : vector<1x2xf32>
      %164 = tpu.matmul %162, %163, %cst_79 {dimension_numbers = #tpu.dot_dimension_numbers<[1], [0], [0], [1], [0, 0, 1, 1], [], []>} : vector<1x256xbf16>, vector<256x2xbf16>, vector<1x2xf32> -> vector<1x2xf32>
      %c0_80 = arith.constant 0 : index
      %c0_81 = arith.constant 0 : index
      %165 = vector.load %arg21[%c0_80, %c0_81] : memref<1x2xf32, #tpu.memory_space<vmem>>, vector<1x2xf32>
      %166 = arith.addf %164, %165 : vector<1x2xf32>
      %c0_82 = arith.constant 0 : index
      %c0_83 = arith.constant 0 : index
      %c0_84 = arith.constant 0 : index
      %167 = vector.load %arg22[%c0_82, %c0_83, %c0_84] : memref<1x1x2xf32, #tpu.memory_space<vmem>>, vector<1x1x2xf32>
      %168 = vector.shape_cast %167 : vector<1x1x2xf32> to vector<1x2xf32>
      %169 = vector.shape_cast %166 : vector<1x2xf32> to vector<1x1x2xf32>
      tpu.vector_store %arg22[%c0_82, %c0_83, %c0_84], %169 {strides = array<i32>} : memref<1x1x2xf32, #tpu.memory_space<vmem>>, vector<1x1x2xf32>,
    } else {
    }
    return
  }
  func.func @transform_0(%arg0: i32, %arg1: i32) -> (i32, i32, i32) {
    %c0_i32 = arith.constant 0 : i32
    %c0_i32_0 = arith.constant 0 : i32
    %c0_i32_1 = arith.constant 0 : i32
    return %arg0, %c0_i32, %c0_i32_0 : i32, i32, i32
  }
  func.func @transform_1(%arg0: i32, %arg1: i32) -> (i32, i32, i32) {
    %c0_i32 = arith.constant 0 : i32
    %c0_i32_0 = arith.constant 0 : i32
    %c0_i32_1 = arith.constant 0 : i32
    return %arg0, %c0_i32, %c0_i32_0 : i32, i32, i32
  }
  func.func @transform_2(%arg0: i32, %arg1: i32) -> (i32, i32) {
    %c0_i32 = arith.constant 0 : i32
    %c0_i32_0 = arith.constant 0 : i32
    %c0_i32_1 = arith.constant 0 : i32
    return %c0_i32, %c0_i32_0 : i32, i32
  }
  func.func @transform_3(%arg0: i32, %arg1: i32) -> (i32, i32) {
    %c0_i32 = arith.constant 0 : i32
    %c0_i32_0 = arith.constant 0 : i32
    %c0_i32_1 = arith.constant 0 : i32
    return %c0_i32, %c0_i32_0 : i32, i32
  }
  func.func @transform_4(%arg0: i32, %arg1: i32) -> (i32, i32, i32) {
    %c0_i32 = arith.constant 0 : i32
    %c0_i32_0 = arith.constant 0 : i32
    %c0_i32_1 = arith.constant 0 : i32
    return %arg1, %c0_i32, %c0_i32_0 : i32, i32, i32
  }
  func.func @transform_5(%arg0: i32, %arg1: i32) -> (i32, i32, i32) {
    %c0_i32 = arith.constant 0 : i32
    %c0_i32_0 = arith.constant 0 : i32
    %c0_i32_1 = arith.constant 0 : i32
    return %arg1, %c0_i32, %c0_i32_0 : i32, i32, i32
  }
  func.func @transform_6(%arg0: i32, %arg1: i32) -> (i32, i32, i32) {
    %c0_i32 = arith.constant 0 : i32
    %c0_i32_0 = arith.constant 0 : i32
    %c0_i32_1 = arith.constant 0 : i32
    return %arg1, %c0_i32, %c0_i32_0 : i32, i32, i32
  }
  func.func @transform_7(%arg0: i32, %arg1: i32) -> (i32, i32, i32) {
    %c0_i32 = arith.constant 0 : i32
    %c0_i32_0 = arith.constant 0 : i32
    %c0_i32_1 = arith.constant 0 : i32
    return %arg1, %c0_i32, %c0_i32_0 : i32, i32, i32
  }
  func.func @transform_8(%arg0: i32, %arg1: i32) -> (i32, i32, i32) {
    %c0_i32 = arith.constant 0 : i32
    %c0_i32_0 = arith.constant 0 : i32
    %c0_i32_1 = arith.constant 0 : i32
    return %arg1, %c0_i32, %c0_i32_0 : i32, i32, i32
  }
  func.func @transform_9(%arg0: i32, %arg1: i32) -> (i32, i32, i32) {
    %c0_i32 = arith.constant 0 : i32
    %c0_i32_0 = arith.constant 0 : i32
    %c0_i32_1 = arith.constant 0 : i32
    return %arg1, %c0_i32, %c0_i32_0 : i32, i32, i32
  }
  func.func @transform_10(%arg0: i32, %arg1: i32) -> (i32, i32, i32) {
    %c0_i32 = arith.constant 0 : i32
    %c0_i32_0 = arith.constant 0 : i32
    %c0_i32_1 = arith.constant 0 : i32
    return %arg1, %c0_i32, %c0_i32_0 : i32, i32, i32
  }
  func.func @transform_11(%arg0: i32, %arg1: i32) -> (i32, i32, i32) {
    %c0_i32 = arith.constant 0 : i32
    %c0_i32_0 = arith.constant 0 : i32
    %c0_i32_1 = arith.constant 0 : i32
    return %arg1, %c0_i32, %c0_i32_0 : i32, i32, i32
  }
  func.func @transform_12(%arg0: i32, %arg1: i32) -> (i32, i32, i32) {
    %c0_i32 = arith.constant 0 : i32
    %c0_i32_0 = arith.constant 0 : i32
    %c0_i32_1 = arith.constant 0 : i32
    return %arg1, %c0_i32, %c0_i32_0 : i32, i32, i32
  }
  func.func @transform_13(%arg0: i32, %arg1: i32) -> (i32, i32, i32) {
    %c0_i32 = arith.constant 0 : i32
    %c0_i32_0 = arith.constant 0 : i32
    %c0_i32_1 = arith.constant 0 : i32
    return %arg1, %c0_i32, %c0_i32_0 : i32, i32, i32
  }
  func.func @transform_14(%arg0: i32, %arg1: i32) -> (i32, i32, i32) {
    %c0_i32 = arith.constant 0 : i32
    %c0_i32_0 = arith.constant 0 : i32
    %c0_i32_1 = arith.constant 0 : i32
    return %arg1, %c0_i32, %c0_i32_0 : i32, i32, i32
  }
  func.func @transform_15(%arg0: i32, %arg1: i32) -> (i32, i32, i32) {
    %c0_i32 = arith.constant 0 : i32
    %c0_i32_0 = arith.constant 0 : i32
    %c0_i32_1 = arith.constant 0 : i32
    return %arg1, %c0_i32, %c0_i32_0 : i32, i32, i32
  }
  func.func @transform_16(%arg0: i32, %arg1: i32) -> (i32, i32) {
    %c0_i32 = arith.constant 0 : i32
    %c0_i32_0 = arith.constant 0 : i32
    %c0_i32_1 = arith.constant 0 : i32
    return %c0_i32, %c0_i32_0 : i32, i32
  }
  func.func @transform_17(%arg0: i32, %arg1: i32) -> (i32, i32) {
    %c0_i32 = arith.constant 0 : i32
    %c0_i32_0 = arith.constant 0 : i32
    %c0_i32_1 = arith.constant 0 : i32
    return %c0_i32, %c0_i32_0 : i32, i32
  }
  func.func @transform_18(%arg0: i32, %arg1: i32) -> (i32, i32) {
    %c0_i32 = arith.constant 0 : i32
    %c0_i32_0 = arith.constant 0 : i32
    %c0_i32_1 = arith.constant 0 : i32
    return %c0_i32, %c0_i32_0 : i32, i32
  }
  func.func @transform_19(%arg0: i32, %arg1: i32) -> (i32, i32) {
    %c0_i32 = arith.constant 0 : i32
    %c0_i32_0 = arith.constant 0 : i32
    %c0_i32_1 = arith.constant 0 : i32
    return %c0_i32, %c0_i32_0 : i32, i32
  }
  func.func @transform_20(%arg0: i32, %arg1: i32) -> (i32, i32, i32) {
    %c0_i32 = arith.constant 0 : i32
    %c0_i32_0 = arith.constant 0 : i32
    %c0_i32_1 = arith.constant 0 : i32
    return %arg0, %c0_i32, %c0_i32_0 : i32, i32, i32
  }
}

</mosaic_0001>

<llo_original>
// kernel: bert_base_forward.1
$region0: #{bert_base_forward.1}
  #allocation0 [shape = 'u32[]', space=smem, size = 0x4, offset = 0x4, fixed_abs, tag = 'smem constant byte address 0x4 - core index']
  #allocation1 [shape = 'u32[144,128]{1,0:T(1,128)}', space=vmem, size = 0x12000, scoped, tag = 'internal scratch']
  #allocation2 [shape = 'f32[16,128]{1,0:T(8,128)}', space=vmem, size = 0x2000, scoped, tag = 'scratch operand']
  %s0 = inlined_call_operand.vmem [shape: f32[2,16,128], index: 0, kind: input, shape index: {}]
  %s1 = inlined_call_operand.vmem [shape: f32[2,1,16], index: 1, kind: input, shape index: {}]
  %s2 = inlined_call_operand.vmem [shape: f32[1,128], index: 2, kind: input, shape index: {}]
  %s3 = inlined_call_operand.vmem [shape: f32[1,128], index: 3, kind: input, shape index: {}]
  %s4 = inlined_call_operand.vmem [shape: bf16[2,128,384], index: 4, kind: input, shape index: {}]
  %s5 = inlined_call_operand.vmem [shape: f32[2,1,384], index: 5, kind: input, shape index: {}]
  %s6 = inlined_call_operand.vmem [shape: bf16[2,128,128], index: 6, kind: input, shape index: {}]
  %s7 = inlined_call_operand.vmem [shape: f32[2,1,128], index: 7, kind: input, shape index: {}, may-alias: {7,9,13,15}]
  %s8 = inlined_call_operand.vmem [shape: f32[2,1,128], index: 8, kind: input, shape index: {}, may-alias: {8,14}]
  %s9 = inlined_call_operand.vmem [shape: f32[2,1,128], index: 9, kind: input, shape index: {}, may-alias: {7,9,13,15}]
  %s10 = inlined_call_operand.vmem [shape: bf16[2,128,512], index: 10, kind: input, shape index: {}]
  %s11 = inlined_call_operand.vmem [shape: f32[2,1,512], index: 11, kind: input, shape index: {}]
  %s12 = inlined_call_operand.vmem [shape: bf16[2,512,128], index: 12, kind: input, shape index: {}]
  %s13 = inlined_call_operand.vmem [shape: f32[2,1,128], index: 13, kind: input, shape index: {}, may-alias: {7,9,13,15}]
  %s14 = inlined_call_operand.vmem [shape: f32[2,1,128], index: 14, kind: input, shape index: {}, may-alias: {8,14}]
  %s15 = inlined_call_operand.vmem [shape: f32[2,1,128], index: 15, kind: input, shape index: {}, may-alias: {7,9,13,15}]
  %s16 = inlined_call_operand.vmem [shape: bf16[128,256], index: 16, kind: input, shape index: {}]
  %s17 = inlined_call_operand.vmem [shape: f32[1,256], index: 17, kind: input, shape index: {}]
  %s18 = inlined_call_operand.vmem [shape: bf16[256,2], index: 18, kind: input, shape index: {}]
  %s19 = inlined_call_operand.vmem [shape: f32[1,2], index: 19, kind: input, shape index: {}]
  %s20 = inlined_call_operand.hbm [shape: f32[2,1,2], index: 20, kind: output, shape index: {}]
  %s21 = sld [smem:[#allocation0]]
  $region121: #{bert_base_forward.1} parent=0
    _
  %s23 = ssub.s32 1, %s21
  %s24 = scalar_select 0, %s23, %s21
  $region1: #{bert_base_forward.1} parent=0
    #allocation3 [shape = 'u8[1024]{0}', space=vmem, size = 0x400, scoped, tag = 'output window, operand 0']
    #allocation4 [shape = 's32[2]{0}', space=sflag, size = 0x8, scoped, tag = 'scoped memory for bert_base_forward.1']
    %25 = vsyncpa [#allocation4], 0
    %s26 = scalar_lea.sflag [#allocation4], 1
    %27 = vsyncpa %s26, 0
    loop: start=0, step=1, limit=6
    $region2: #{bert_base_forward.1} parent=1 // loop_pre_header
      _
    $region3: #{bert_base_forward.1} parent=1 // loop_header
      %s29 = sphi 0, %s33
      %p30 = scmp.ge.s32.totalorder %s29, 6
      %s36 = sphi 0, %s48
      %s37 = sphi 0, %s44
      %s38 = sphi 0, %s36
      %s39 = sphi 0, %s37
      %s40 = sphi 0, %s38
      %s41 = sphi 0, %s39
      %s51 = sphi 0, %s53
      %s54 = sphi 0, %s51
      %s55 = sphi 0, %s54
      %s71 = sphi 0, %s55
      %s77 = sphi 0, %s79
      %s80 = sphi 0, %s77
      %s81 = sphi 0, %s80
      %s97 = sphi 0, %s81
      %s101 = sphi 0, %s101
      %s103 = sphi 0, %s101
      %s104 = sphi 0, %s103
      %s118 = sphi 0, %s104
      %s122 = sphi 0, %s122
      %s124 = sphi 0, %s122
      %s125 = sphi 0, %s124
      %s139 = sphi 0, %s125
      %s145 = sphi 0, %s147
      %s148 = sphi 0, %s145
      %s149 = sphi 0, %s148
      %s165 = sphi 0, %s149
      %s171 = sphi 0, %s173
      %s174 = sphi 0, %s171
      %s175 = sphi 0, %s174
      %s191 = sphi 0, %s175
      %s197 = sphi 0, %s199
      %s200 = sphi 0, %s197
      %s201 = sphi 0, %s200
      %s217 = sphi 0, %s201
      %s223 = sphi 0, %s225
      %s226 = sphi 0, %s223
      %s227 = sphi 0, %s226
      %s243 = sphi 0, %s227
      %s249 = sphi 0, %s251
      %s252 = sphi 0, %s249
      %s253 = sphi 0, %s252
      %s269 = sphi 0, %s253
      %s275 = sphi 0, %s277
      %s278 = sphi 0, %s275
      %s279 = sphi 0, %s278
      %s295 = sphi 0, %s279
      %s301 = sphi 0, %s303
      %s304 = sphi 0, %s301
      %s305 = sphi 0, %s304
      %s321 = sphi 0, %s305
      %s327 = sphi 0, %s329
      %s330 = sphi 0, %s327
      %s331 = sphi 0, %s330
      %s347 = sphi 0, %s331
      %s353 = sphi 0, %s355
      %s356 = sphi 0, %s353
      %s357 = sphi 0, %s356
      %s373 = sphi 0, %s357
      %s379 = sphi 0, %s381
      %s382 = sphi 0, %s379
      %s383 = sphi 0, %s382
      %s399 = sphi 0, %s383
      %s405 = sphi 0, %s407
      %s408 = sphi 0, %s405
      %s409 = sphi 0, %s408
      %s425 = sphi 0, %s409
      %s431 = sphi 0, %s433
      %s434 = sphi 0, %s431
      %s435 = sphi 0, %s434
      %s451 = sphi 0, %s435
      %s455 = sphi 0, %s455
      %s457 = sphi 0, %s455
      %s458 = sphi 0, %s457
      %s472 = sphi 0, %s458
      %s476 = sphi 0, %s476
      %s478 = sphi 0, %s476
      %s479 = sphi 0, %s478
      %s493 = sphi 0, %s479
      %s497 = sphi 0, %s497
      %s499 = sphi 0, %s497
      %s500 = sphi 0, %s499
      %s514 = sphi 0, %s500
      %s518 = sphi 0, %s518
      %s520 = sphi 0, %s518
      %s521 = sphi 0, %s520
      %s535 = sphi 0, %s521
      %s541 = sphi 0, %s543
      %s544 = sphi 0, %s541
      %s545 = sphi 0, %s544
      %s561 = sphi 0, %s545
    $region4: #{bert_base_forward.1} parent=1 // loop_header_branch
      %32 = sbr.rel (%p30) target = $region8
    $region5: #{bert_base_forward.1} parent=1 // loop_body
      %s34 = ssub.s32 %s29, 1
      %s35 = ssub.s32 %s29, 2
      %s42 = sadd.s32 1, %s37
      %p43 = scmp.ge.s32.totalorder %s42, 2
      %s44 = scalar_select %p43, 0, %s42
      %s45 = sadd.s32 1, %s36
      %s46 = scalar_select %p43, %s45, %s36
      %p47 = scmp.ge.s32.totalorder %s46, 2
      %s48 = scalar_select %p47, 0, %s46
      %s49 = ssub.s32 %s36, %s48
      %p50 = scmp.eq.s32.totalorder %s49, 0
      %s52 = sadd.s32 %s51, 1
      %s53 = scalar_select %p50, %s51, %s52
      %p56 = pneg %p50
      %p57 = scmp.eq.s32.totalorder %s29, 3
      %p58 = por %p56, %p57
      %p59 = scmp.ne.s32.totalorder %s51, %s54
      %p60 = scmp.eq.s32.totalorder %s29, 0
      %p61 = por %p59, %p60
      %p62 = scmp.ne.s32.totalorder %s51, %s54
      %p63 = scmp.eq.s32.totalorder %s34, 3
      %p64 = por %p62, %p63
      %p65 = scmp.ne.s32.totalorder %s54, %s55
      %p66 = scmp.eq.s32.totalorder %s34, 0
      %p67 = por %p65, %p66
      %p68 = scmp.ne.s32.totalorder %s54, %s55
      %p69 = scmp.eq.s32.totalorder %s35, 3
      %p70 = por %p68, %p69
      %p72 = scmp.ne.s32.totalorder %s55, %s71
      %p73 = scmp.eq.s32.totalorder %s35, 0
      %p74 = por %p72, %p73
      %s75 = ssub.s32 %s36, %s48
      %p76 = scmp.eq.s32.totalorder %s75, 0
      %s78 = sadd.s32 %s77, 1
      %s79 = scalar_select %p76, %s77, %s78
      %p82 = pneg %p76
      %p83 = scmp.eq.s32.totalorder %s29, 3
      %p84 = por %p82, %p83
      %p85 = scmp.ne.s32.totalorder %s77, %s80
      %p86 = scmp.eq.s32.totalorder %s29, 0
      %p87 = por %p85, %p86
      %p88 = scmp.ne.s32.totalorder %s77, %s80
      %p89 = scmp.eq.s32.totalorder %s34, 3
      %p90 = por %p88, %p89
      %p91 = scmp.ne.s32.totalorder %s80, %s81
      %p92 = scmp.eq.s32.totalorder %s34, 0
      %p93 = por %p91, %p92
      %p94 = scmp.ne.s32.totalorder %s80, %s81
      %p95 = scmp.eq.s32.totalorder %s35, 3
      %p96 = por %p94, %p95
      %p98 = scmp.ne.s32.totalorder %s81, %s97
      %p99 = scmp.eq.s32.totalorder %s35, 0
      %p100 = por %p98, %p99
      %s102 = sadd.s32 %s101, 1
      %p105 = scmp.eq.s32.totalorder %s29, 3
      %p106 = scmp.ne.s32.totalorder %s101, %s103
      %p107 = scmp.eq.s32.totalorder %s29, 0
      %p108 = por %p106, %p107
      %p109 = scmp.ne.s32.totalorder %s101, %s103
      %p110 = scmp.eq.s32.totalorder %s34, 3
      %p111 = por %p109, %p110
      %p112 = scmp.ne.s32.totalorder %s103, %s104
      %p113 = scmp.eq.s32.totalorder %s34, 0
      %p114 = por %p112, %p113
      %p115 = scmp.ne.s32.totalorder %s103, %s104
      %p116 = scmp.eq.s32.totalorder %s35, 3
      %p117 = por %p115, %p116
      %p119 = scmp.ne.s32.totalorder %s104, %s118
      %p120 = scmp.eq.s32.totalorder %s35, 0
      %p121 = por %p119, %p120
      %s123 = sadd.s32 %s122, 1
      %p126 = scmp.eq.s32.totalorder %s29, 3
      %p127 = scmp.ne.s32.totalorder %s122, %s124
      %p128 = scmp.eq.s32.totalorder %s29, 0
      %p129 = por %p127, %p128
      %p130 = scmp.ne.s32.totalorder %s122, %s124
      %p131 = scmp.eq.s32.totalorder %s34, 3
      %p132 = por %p130, %p131
      %p133 = scmp.ne.s32.totalorder %s124, %s125
      %p134 = scmp.eq.s32.totalorder %s34, 0
      %p135 = por %p133, %p134
      %p136 = scmp.ne.s32.totalorder %s124, %s125
      %p137 = scmp.eq.s32.totalorder %s35, 3
      %p138 = por %p136, %p137
      %p140 = scmp.ne.s32.totalorder %s125, %s139
      %p141 = scmp.eq.s32.totalorder %s35, 0
      %p142 = por %p140, %p141
      %s143 = ssub.s32 %s37, %s44
      %p144 = scmp.eq.s32.totalorder %s143, 0
      %s146 = sadd.s32 %s145, 1
      %s147 = scalar_select %p144, %s145, %s146
      %p150 = pneg %p144
      %p151 = scmp.eq.s32.totalorder %s29, 3
      %p152 = por %p150, %p151
      %p153 = scmp.ne.s32.totalorder %s145, %s148
      %p154 = scmp.eq.s32.totalorder %s29, 0
      %p155 = por %p153, %p154
      %p156 = scmp.ne.s32.totalorder %s145, %s148
      %p157 = scmp.eq.s32.totalorder %s34, 3
      %p158 = por %p156, %p157
      %p159 = scmp.ne.s32.totalorder %s148, %s149
      %p160 = scmp.eq.s32.totalorder %s34, 0
      %p161 = por %p159, %p160
      %p162 = scmp.ne.s32.totalorder %s148, %s149
      %p163 = scmp.eq.s32.totalorder %s35, 3
      %p164 = por %p162, %p163
      %p166 = scmp.ne.s32.totalorder %s149, %s165
      %p167 = scmp.eq.s32.totalorder %s35, 0
      %p168 = por %p166, %p167
      %s169 = ssub.s32 %s37, %s44
      %p170 = scmp.eq.s32.totalorder %s169, 0
      %s172 = sadd.s32 %s171, 1
      %s173 = scalar_select %p170, %s171, %s172
      %p176 = pneg %p170
      %p177 = scmp.eq.s32.totalorder %s29, 3
      %p178 = por %p176, %p177
      %p179 = scmp.ne.s32.totalorder %s171, %s174
      %p180 = scmp.eq.s32.totalorder %s29, 0
      %p181 = por %p179, %p180
      %p182 = scmp.ne.s32.totalorder %s171, %s174
      %p183 = scmp.eq.s32.totalorder %s34, 3
      %p184 = por %p182, %p183
      %p185 = scmp.ne.s32.totalorder %s174, %s175
      %p186 = scmp.eq.s32.totalorder %s34, 0
      %p187 = por %p185, %p186
      %p188 = scmp.ne.s32.totalorder %s174, %s175
      %p189 = scmp.eq.s32.totalorder %s35, 3
      %p190 = por %p188, %p189
      %p192 = scmp.ne.s32.totalorder %s175, %s191
      %p193 = scmp.eq.s32.totalorder %s35, 0
      %p194 = por %p192, %p193
      %s195 = ssub.s32 %s37, %s44
      %p196 = scmp.eq.s32.totalorder %s195, 0
      %s198 = sadd.s32 %s197, 1
      %s199 = scalar_select %p196, %s197, %s198
      %p202 = pneg %p196
      %p203 = scmp.eq.s32.totalorder %s29, 3
      %p204 = por %p202, %p203
      %p205 = scmp.ne.s32.totalorder %s197, %s200
      %p206 = scmp.eq.s32.totalorder %s29, 0
      %p207 = por %p205, %p206
      %p208 = scmp.ne.s32.totalorder %s197, %s200
      %p209 = scmp.eq.s32.totalorder %s34, 3
      %p210 = por %p208, %p209
      %p211 = scmp.ne.s32.totalorder %s200, %s201
      %p212 = scmp.eq.s32.totalorder %s34, 0
      %p213 = por %p211, %p212
      %p214 = scmp.ne.s32.totalorder %s200, %s201
      %p215 = scmp.eq.s32.totalorder %s35, 3
      %p216 = por %p214, %p215
      %p218 = scmp.ne.s32.totalorder %s201, %s217
      %p219 = scmp.eq.s32.totalorder %s35, 0
      %p220 = por %p218, %p219
      %s221 = ssub.s32 %s37, %s44
      %p222 = scmp.eq.s32.totalorder %s221, 0
      %s224 = sadd.s32 %s223, 1
      %s225 = scalar_select %p222, %s223, %s224
      %p228 = pneg %p222
      %p229 = scmp.eq.s32.totalorder %s29, 3
      %p230 = por %p228, %p229
      %p231 = scmp.ne.s32.totalorder %s223, %s226
      %p232 = scmp.eq.s32.totalorder %s29, 0
      %p233 = por %p231, %p232
      %p234 = scmp.ne.s32.totalorder %s223, %s226
      %p235 = scmp.eq.s32.totalorder %s34, 3
      %p236 = por %p234, %p235
      %p237 = scmp.ne.s32.totalorder %s226, %s227
      %p238 = scmp.eq.s32.totalorder %s34, 0
      %p239 = por %p237, %p238
      %p240 = scmp.ne.s32.totalorder %s226, %s227
      %p241 = scmp.eq.s32.totalorder %s35, 3
      %p242 = por %p240, %p241
      %p244 = scmp.ne.s32.totalorder %s227, %s243
      %p245 = scmp.eq.s32.totalorder %s35, 0
      %p246 = por %p244, %p245
      %s247 = ssub.s32 %s37, %s44
      %p248 = scmp.eq.s32.totalorder %s247, 0
      %s250 = sadd.s32 %s249, 1
      %s251 = scalar_select %p248, %s249, %s250
      %p254 = pneg %p248
      %p255 = scmp.eq.s32.totalorder %s29, 3
      %p256 = por %p254, %p255
      %p257 = scmp.ne.s32.totalorder %s249, %s252
      %p258 = scmp.eq.s32.totalorder %s29, 0
      %p259 = por %p257, %p258
      %p260 = scmp.ne.s32.totalorder %s249, %s252
      %p261 = scmp.eq.s32.totalorder %s34, 3
      %p262 = por %p260, %p261
      %p263 = scmp.ne.s32.totalorder %s252, %s253
      %p264 = scmp.eq.s32.totalorder %s34, 0
      %p265 = por %p263, %p264
      %p266 = scmp.ne.s32.totalorder %s252, %s253
      %p267 = scmp.eq.s32.totalorder %s35, 3
      %p268 = por %p266, %p267
      %p270 = scmp.ne.s32.totalorder %s253, %s269
      %p271 = scmp.eq.s32.totalorder %s35, 0
      %p272 = por %p270, %p271
      %s273 = ssub.s32 %s37, %s44
      %p274 = scmp.eq.s32.totalorder %s273, 0
      %s276 = sadd.s32 %s275, 1
      %s277 = scalar_select %p274, %s275, %s276
      %p280 = pneg %p274
      %p281 = scmp.eq.s32.totalorder %s29, 3
      %p282 = por %p280, %p281
      %p283 = scmp.ne.s32.totalorder %s275, %s278
      %p284 = scmp.eq.s32.totalorder %s29, 0
      %p285 = por %p283, %p284
      %p286 = scmp.ne.s32.totalorder %s275, %s278
      %p287 = scmp.eq.s32.totalorder %s34, 3
      %p288 = por %p286, %p287
      %p289 = scmp.ne.s32.totalorder %s278, %s279
      %p290 = scmp.eq.s32.totalorder %s34, 0
      %p291 = por %p289, %p290
      %p292 = scmp.ne.s32.totalorder %s278, %s279
      %p293 = scmp.eq.s32.totalorder %s35, 3
      %p294 = por %p292, %p293
      %p296 = scmp.ne.s32.totalorder %s279, %s295
      %p297 = scmp.eq.s32.totalorder %s35, 0
      %p298 = por %p296, %p297
      %s299 = ssub.s32 %s37, %s44
      %p300 = scmp.eq.s32.totalorder %s299, 0
      %s302 = sadd.s32 %s301, 1
      %s303 = scalar_select %p300, %s301, %s302
      %p306 = pneg %p300
      %p307 = scmp.eq.s32.totalorder %s29, 3
      %p308 = por %p306, %p307
      %p309 = scmp.ne.s32.totalorder %s301, %s304
      %p310 = scmp.eq.s32.totalorder %s29, 0
      %p311 = por %p309, %p310
      %p312 = scmp.ne.s32.totalorder %s301, %s304
      %p313 = scmp.eq.s32.totalorder %s34, 3
      %p314 = por %p312, %p313
      %p315 = scmp.ne.s32.totalorder %s304, %s305
      %p316 = scmp.eq.s32.totalorder %s34, 0
      %p317 = por %p315, %p316
      %p318 = scmp.ne.s32.totalorder %s304, %s305
      %p319 = scmp.eq.s32.totalorder %s35, 3
      %p320 = por %p318, %p319
      %p322 = scmp.ne.s32.totalorder %s305, %s321
      %p323 = scmp.eq.s32.totalorder %s35, 0
      %p324 = por %p322, %p323
      %s325 = ssub.s32 %s37, %s44
      %p326 = scmp.eq.s32.totalorder %s325, 0
      %s328 = sadd.s32 %s327, 1
      %s329 = scalar_select %p326, %s327, %s328
      %p332 = pneg %p326
      %p333 = scmp.eq.s32.totalorder %s29, 3
      %p334 = por %p332, %p333
      %p335 = scmp.ne.s32.totalorder %s327, %s330
      %p336 = scmp.eq.s32.totalorder %s29, 0
      %p337 = por %p335, %p336
      %p338 = scmp.ne.s32.totalorder %s327, %s330
      %p339 = scmp.eq.s32.totalorder %s34, 3
      %p340 = por %p338, %p339
      %p341 = scmp.ne.s32.totalorder %s330, %s331
      %p342 = scmp.eq.s32.totalorder %s34, 0
      %p343 = por %p341, %p342
      %p344 = scmp.ne.s32.totalorder %s330, %s331
      %p345 = scmp.eq.s32.totalorder %s35, 3
      %p346 = por %p344, %p345
      %p348 = scmp.ne.s32.totalorder %s331, %s347
      %p349 = scmp.eq.s32.totalorder %s35, 0
      %p350 = por %p348, %p349
      %s351 = ssub.s32 %s37, %s44
      %p352 = scmp.eq.s32.totalorder %s351, 0
      %s354 = sadd.s32 %s353, 1
      %s355 = scalar_select %p352, %s353, %s354
      %p358 = pneg %p352
      %p359 = scmp.eq.s32.totalorder %s29, 3
      %p360 = por %p358, %p359
      %p361 = scmp.ne.s32.totalorder %s353, %s356
      %p362 = scmp.eq.s32.totalorder %s29, 0
      %p363 = por %p361, %p362
      %p364 = scmp.ne.s32.totalorder %s353, %s356
      %p365 = scmp.eq.s32.totalorder %s34, 3
      %p366 = por %p364, %p365
      %p367 = scmp.ne.s32.totalorder %s356, %s357
      %p368 = scmp.eq.s32.totalorder %s34, 0
      %p369 = por %p367, %p368
      %p370 = scmp.ne.s32.totalorder %s356, %s357
      %p371 = scmp.eq.s32.totalorder %s35, 3
      %p372 = por %p370, %p371
      %p374 = scmp.ne.s32.totalorder %s357, %s373
      %p375 = scmp.eq.s32.totalorder %s35, 0
      %p376 = por %p374, %p375
      %s377 = ssub.s32 %s37, %s44
      %p378 = scmp.eq.s32.totalorder %s377, 0
      %s380 = sadd.s32 %s379, 1
      %s381 = scalar_select %p378, %s379, %s380
      %p384 = pneg %p378
      %p385 = scmp.eq.s32.totalorder %s29, 3
      %p386 = por %p384, %p385
      %p387 = scmp.ne.s32.totalorder %s379, %s382
      %p388 = scmp.eq.s32.totalorder %s29, 0
      %p389 = por %p387, %p388
      %p390 = scmp.ne.s32.totalorder %s379, %s382
      %p391 = scmp.eq.s32.totalorder %s34, 3
      %p392 = por %p390, %p391
      %p393 = scmp.ne.s32.totalorder %s382, %s383
      %p394 = scmp.eq.s32.totalorder %s34, 0
      %p395 = por %p393, %p394
      %p396 = scmp.ne.s32.totalorder %s382, %s383
      %p397 = scmp.eq.s32.totalorder %s35, 3
      %p398 = por %p396, %p397
      %p400 = scmp.ne.s32.totalorder %s383, %s399
      %p401 = scmp.eq.s32.totalorder %s35, 0
      %p402 = por %p400, %p401
      %s403 = ssub.s32 %s37, %s44
      %p404 = scmp.eq.s32.totalorder %s403, 0
      %s406 = sadd.s32 %s405, 1
      %s407 = scalar_select %p404, %s405, %s406
      %p410 = pneg %p404
      %p411 = scmp.eq.s32.totalorder %s29, 3
      %p412 = por %p410, %p411
      %p413 = scmp.ne.s32.totalorder %s405, %s408
      %p414 = scmp.eq.s32.totalorder %s29, 0
      %p415 = por %p413, %p414
      %p416 = scmp.ne.s32.totalorder %s405, %s408
      %p417 = scmp.eq.s32.totalorder %s34, 3
      %p418 = por %p416, %p417
      %p419 = scmp.ne.s32.totalorder %s408, %s409
      %p420 = scmp.eq.s32.totalorder %s34, 0
      %p421 = por %p419, %p420
      %p422 = scmp.ne.s32.totalorder %s408, %s409
      %p423 = scmp.eq.s32.totalorder %s35, 3
      %p424 = por %p422, %p423
      %p426 = scmp.ne.s32.totalorder %s409, %s425
      %p427 = scmp.eq.s32.totalorder %s35, 0
      %p428 = por %p426, %p427
      %s429 = ssub.s32 %s37, %s44
      %p430 = scmp.eq.s32.totalorder %s429, 0
      %s432 = sadd.s32 %s431, 1
      %s433 = scalar_select %p430, %s431, %s432
      %p436 = pneg %p430
      %p437 = scmp.eq.s32.totalorder %s29, 3
      %p438 = por %p436, %p437
      %p439 = scmp.ne.s32.totalorder %s431, %s434
      %p440 = scmp.eq.s32.totalorder %s29, 0
      %p441 = por %p439, %p440
      %p442 = scmp.ne.s32.totalorder %s431, %s434
      %p443 = scmp.eq.s32.totalorder %s34, 3
      %p444 = por %p442, %p443
      %p445 = scmp.ne.s32.totalorder %s434, %s435
      %p446 = scmp.eq.s32.totalorder %s34, 0
      %p447 = por %p445, %p446
      %p448 = scmp.ne.s32.totalorder %s434, %s435
      %p449 = scmp.eq.s32.totalorder %s35, 3
      %p450 = por %p448, %p449
      %p452 = scmp.ne.s32.totalorder %s435, %s451
      %p453 = scmp.eq.s32.totalorder %s35, 0
      %p454 = por %p452, %p453
      %s456 = sadd.s32 %s455, 1
      %p459 = scmp.eq.s32.totalorder %s29, 3
      %p460 = scmp.ne.s32.totalorder %s455, %s457
      %p461 = scmp.eq.s32.totalorder %s29, 0
      %p462 = por %p460, %p461
      %p463 = scmp.ne.s32.totalorder %s455, %s457
      %p464 = scmp.eq.s32.totalorder %s34, 3
      %p465 = por %p463, %p464
      %p466 = scmp.ne.s32.totalorder %s457, %s458
      %p467 = scmp.eq.s32.totalorder %s34, 0
      %p468 = por %p466, %p467
      %p469 = scmp.ne.s32.totalorder %s457, %s458
      %p470 = scmp.eq.s32.totalorder %s35, 3
      %p471 = por %p469, %p470
      %p473 = scmp.ne.s32.totalorder %s458, %s472
      %p474 = scmp.eq.s32.totalorder %s35, 0
      %p475 = por %p473, %p474
      %s477 = sadd.s32 %s476, 1
      %p480 = scmp.eq.s32.totalorder %s29, 3
      %p481 = scmp.ne.s32.totalorder %s476, %s478
      %p482 = scmp.eq.s32.totalorder %s29, 0
      %p483 = por %p481, %p482
      %p484 = scmp.ne.s32.totalorder %s476, %s478
      %p485 = scmp.eq.s32.totalorder %s34, 3
      %p486 = por %p484, %p485
      %p487 = scmp.ne.s32.totalorder %s478, %s479
      %p488 = scmp.eq.s32.totalorder %s34, 0
      %p489 = por %p487, %p488
      %p490 = scmp.ne.s32.totalorder %s478, %s479
      %p491 = scmp.eq.s32.totalorder %s35, 3
      %p492 = por %p490, %p491
      %p494 = scmp.ne.s32.totalorder %s479, %s493
      %p495 = scmp.eq.s32.totalorder %s35, 0
      %p496 = por %p494, %p495
      %s498 = sadd.s32 %s497, 1
      %p501 = scmp.eq.s32.totalorder %s29, 3
      %p502 = scmp.ne.s32.totalorder %s497, %s499
      %p503 = scmp.eq.s32.totalorder %s29, 0
      %p504 = por %p502, %p503
      %p505 = scmp.ne.s32.totalorder %s497, %s499
      %p506 = scmp.eq.s32.totalorder %s34, 3
      %p507 = por %p505, %p506
      %p508 = scmp.ne.s32.totalorder %s499, %s500
      %p509 = scmp.eq.s32.totalorder %s34, 0
      %p510 = por %p508, %p509
      %p511 = scmp.ne.s32.totalorder %s499, %s500
      %p512 = scmp.eq.s32.totalorder %s35, 3
      %p513 = por %p511, %p512
      %p515 = scmp.ne.s32.totalorder %s500, %s514
      %p516 = scmp.eq.s32.totalorder %s35, 0
      %p517 = por %p515, %p516
      %s519 = sadd.s32 %s518, 1
      %p522 = scmp.eq.s32.totalorder %s29, 3
      %p523 = scmp.ne.s32.totalorder %s518, %s520
      %p524 = scmp.eq.s32.totalorder %s29, 0
      %p525 = por %p523, %p524
      %p526 = scmp.ne.s32.totalorder %s518, %s520
      %p527 = scmp.eq.s32.totalorder %s34, 3
      %p528 = por %p526, %p527
      %p529 = scmp.ne.s32.totalorder %s520, %s521
      %p530 = scmp.eq.s32.totalorder %s34, 0
      %p531 = por %p529, %p530
      %p532 = scmp.ne.s32.totalorder %s520, %s521
      %p533 = scmp.eq.s32.totalorder %s35, 3
      %p534 = por %p532, %p533
      %p536 = scmp.ne.s32.totalorder %s521, %s535
      %p537 = scmp.eq.s32.totalorder %s35, 0
      %p538 = por %p536, %p537
      %s539 = ssub.s32 %s36, %s48
      %p540 = scmp.eq.s32.totalorder %s539, 0
      %s542 = sadd.s32 %s541, 1
      %s543 = scalar_select %p540, %s541, %s542
      %p546 = pneg %p540
      %p547 = scmp.eq.s32.totalorder %s29, 3
      %p548 = por %p546, %p547
      %p549 = scmp.ne.s32.totalorder %s541, %s544
      %p550 = scmp.eq.s32.totalorder %s29, 0
      %p551 = por %p549, %p550
      %p552 = scmp.ne.s32.totalorder %s541, %s544
      %p553 = scmp.eq.s32.totalorder %s34, 3
      %p554 = por %p552, %p553
      %p555 = scmp.ne.s32.totalorder %s544, %s545
      %p556 = scmp.eq.s32.totalorder %s34, 0
      %p557 = por %p555, %p556
      %p558 = scmp.ne.s32.totalorder %s544, %s545
      %p559 = scmp.eq.s32.totalorder %s35, 3
      %p560 = por %p558, %p559
      %p562 = scmp.ne.s32.totalorder %s545, %s561
      %p563 = scmp.eq.s32.totalorder %s35, 0
      %p564 = por %p562, %p563
      %p565 = scmp.le.s32.totalorder 1, %s29
      %p566 = scmp.lt.s32.totalorder %s29, 5
      %p567 = pnand %p565, %p566
      %p568 = pneg %p567
      // Predicated region
      $region9: #{bert_base_forward.1} parent=5 // pred_check
        _
      $region10: #{bert_base_forward.1} parent=5 // pred_check_branch
        %570 = sbr.rel (%p567) target = $region12
      $region11: #{bert_base_forward.1} parent=5 // pred_region
        %s571 = ssub.s32 %s29, 1
        // Predicated region
        $region13: #{bert_base_forward.1} parent=11 // pred_check
          %p572 = pneg %p114
        $region14: #{bert_base_forward.1} parent=11 // pred_check_branch
          %574 = sbr.rel (%p572) target = $region16
        $region15: #{bert_base_forward.1} parent=11 // pred_region
          _
        $region16: #{bert_base_forward.1} parent=11 // pred_fallthru
          _
        // Predicated region
        $region17: #{bert_base_forward.1} parent=11 // pred_check
          %p575 = pneg %p135
        $region18: #{bert_base_forward.1} parent=11 // pred_check_branch
          %577 = sbr.rel (%p575) target = $region20
        $region19: #{bert_base_forward.1} parent=11 // pred_region
          _
        $region20: #{bert_base_forward.1} parent=11 // pred_fallthru
          _
        // Predicated region
        $region21: #{bert_base_forward.1} parent=11 // pred_check
          %p578 = pneg %p468
        $region22: #{bert_base_forward.1} parent=11 // pred_check_branch
          %580 = sbr.rel (%p578) target = $region24
        $region23: #{bert_base_forward.1} parent=11 // pred_region
          _
        $region24: #{bert_base_forward.1} parent=11 // pred_fallthru
          _
        // Predicated region
        $region25: #{bert_base_forward.1} parent=11 // pred_check
          %p581 = pneg %p489
        $region26: #{bert_base_forward.1} parent=11 // pred_check_branch
          %583 = sbr.rel (%p581) target = $region28
        $region27: #{bert_base_forward.1} parent=11 // pred_region
          _
        $region28: #{bert_base_forward.1} parent=11 // pred_fallthru
          _
        // Predicated region
        $region29: #{bert_base_forward.1} parent=11 // pred_check
          %p584 = pneg %p510
        $region30: #{bert_base_forward.1} parent=11 // pred_check_branch
          %586 = sbr.rel (%p584) target = $region32
        $region31: #{bert_base_forward.1} parent=11 // pred_region
          _
        $region32: #{bert_base_forward.1} parent=11 // pred_fallthru
          _
        // Predicated region
        $region33: #{bert_base_forward.1} parent=11 // pred_check
          %p587 = pneg %p531
        $region34: #{bert_base_forward.1} parent=11 // pred_check_branch
          %589 = sbr.rel (%p587) target = $region36
        $region35: #{bert_base_forward.1} parent=11 // pred_region
          _
        $region36: #{bert_base_forward.1} parent=11 // pred_fallthru
          _
      $region12: #{bert_base_forward.1} parent=5 // pred_fallthru
        _
      %p590 = scmp.lt.s32.totalorder %s29, 4
      // Predicated region
      $region37: #{bert_base_forward.1} parent=5 // pred_check
        %p591 = pneg %p590
      $region38: #{bert_base_forward.1} parent=5 // pred_check_branch
        %593 = sbr.rel (%p591) target = $region40
      $region39: #{bert_base_forward.1} parent=5 // pred_region
        // Predicated region
        $region41: #{bert_base_forward.1} parent=39 // pred_check
          %p594 = pneg %p61
        $region42: #{bert_base_forward.1} parent=39 // pred_check_branch
          %596 = sbr.rel (%p594) target = $region44
        $region43: #{bert_base_forward.1} parent=39 // pred_region
          %p597 = scmp.lt.s32.totalorder %s36, 1
          %s598 = scalar_select %p597, %s36, 1
          %s599 = smul.addr %s598, 2
          %s600 = smul.addr %s599, 8
          %s601 = scalar_lea.vmem %s0, %s600
        $region44: #{bert_base_forward.1} parent=39 // pred_fallthru
          _
        // Predicated region
        $region45: #{bert_base_forward.1} parent=39 // pred_check
          %p602 = pneg %p87
        $region46: #{bert_base_forward.1} parent=39 // pred_check_branch
          %604 = sbr.rel (%p602) target = $region48
        $region47: #{bert_base_forward.1} parent=39 // pred_region
          %p605 = scmp.lt.s32.totalorder %s36, 1
          %s606 = scalar_select %p605, %s36, 1
          %s607 = scalar_lea.vmem %s1, %s606
        $region48: #{bert_base_forward.1} parent=39 // pred_fallthru
          _
        // Predicated region
        $region49: #{bert_base_forward.1} parent=39 // pred_check
          %p608 = pneg %p155
        $region50: #{bert_base_forward.1} parent=39 // pred_check_branch
          %610 = sbr.rel (%p608) target = $region52
        $region51: #{bert_base_forward.1} parent=39 // pred_region
          %p611 = scmp.lt.s32.totalorder %s37, 1
          %s612 = scalar_select %p611, %s37, 1
          %s613 = smul.addr %s612, 48
          %s614 = smul.addr %s613, 4
          %s615 = scalar_lea.vmem %s4, %s614
        $region52: #{bert_base_forward.1} parent=39 // pred_fallthru
          _
        // Predicated region
        $region53: #{bert_base_forward.1} parent=39 // pred_check
          %p616 = pneg %p181
        $region54: #{bert_base_forward.1} parent=39 // pred_check_branch
          %618 = sbr.rel (%p616) target = $region56
        $region55: #{bert_base_forward.1} parent=39 // pred_region
          %p619 = scmp.lt.s32.totalorder %s37, 1
          %s620 = scalar_select %p619, %s37, 1
          %s621 = smul.addr %s620, 3
          %s622 = scalar_lea.vmem %s5, %s621
        $region56: #{bert_base_forward.1} parent=39 // pred_fallthru
          _
        // Predicated region
        $region57: #{bert_base_forward.1} parent=39 // pred_check
          %p623 = pneg %p207
        $region58: #{bert_base_forward.1} parent=39 // pred_check_branch
          %625 = sbr.rel (%p623) target = $region60
        $region59: #{bert_base_forward.1} parent=39 // pred_region
          %p626 = scmp.lt.s32.totalorder %s37, 1
          %s627 = scalar_select %p626, %s37, 1
          %s628 = smul.addr %s627, 16
          %s629 = smul.addr %s628, 4
          %s630 = scalar_lea.vmem %s6, %s629
        $region60: #{bert_base_forward.1} parent=39 // pred_fallthru
          _
        // Predicated region
        $region61: #{bert_base_forward.1} parent=39 // pred_check
          %p631 = pneg %p233
        $region62: #{bert_base_forward.1} parent=39 // pred_check_branch
          %633 = sbr.rel (%p631) target = $region64
        $region63: #{bert_base_forward.1} parent=39 // pred_region
          %p634 = scmp.lt.s32.totalorder %s37, 1
          %s635 = scalar_select %p634, %s37, 1
          %s636 = scalar_lea.vmem %s7, %s635
        $region64: #{bert_base_forward.1} parent=39 // pred_fallthru
          _
        // Predicated region
        $region65: #{bert_base_forward.1} parent=39 // pred_check
          %p637 = pneg %p259
        $region66: #{bert_base_forward.1} parent=39 // pred_check_branch
          %639 = sbr.rel (%p637) target = $region68
        $region67: #{bert_base_forward.1} parent=39 // pred_region
          %p640 = scmp.lt.s32.totalorder %s37, 1
          %s641 = scalar_select %p640, %s37, 1
          %s642 = scalar_lea.vmem %s8, %s641
        $region68: #{bert_base_forward.1} parent=39 // pred_fallthru
          _
        // Predicated region
        $region69: #{bert_base_forward.1} parent=39 // pred_check
          %p643 = pneg %p285
        $region70: #{bert_base_forward.1} parent=39 // pred_check_branch
          %645 = sbr.rel (%p643) target = $region72
        $region71: #{bert_base_forward.1} parent=39 // pred_region
          %p646 = scmp.lt.s32.totalorder %s37, 1
          %s647 = scalar_select %p646, %s37, 1
          %s648 = scalar_lea.vmem %s9, %s647
        $region72: #{bert_base_forward.1} parent=39 // pred_fallthru
          _
        // Predicated region
        $region73: #{bert_base_forward.1} parent=39 // pred_check
          %p649 = pneg %p311
        $region74: #{bert_base_forward.1} parent=39 // pred_check_branch
          %651 = sbr.rel (%p649) target = $region76
        $region75: #{bert_base_forward.1} parent=39 // pred_region
          %p652 = scmp.lt.s32.totalorder %s37, 1
          %s653 = scalar_select %p652, %s37, 1
          %s654 = smul.addr %s653, 64
          %s655 = smul.addr %s654, 4
          %s656 = scalar_lea.vmem %s10, %s655
        $region76: #{bert_base_forward.1} parent=39 // pred_fallthru
          _
        // Predicated region
        $region77: #{bert_base_forward.1} parent=39 // pred_check
          %p657 = pneg %p337
        $region78: #{bert_base_forward.1} parent=39 // pred_check_branch
          %659 = sbr.rel (%p657) target = $region80
        $region79: #{bert_base_forward.1} parent=39 // pred_region
          %p660 = scmp.lt.s32.totalorder %s37, 1
          %s661 = scalar_select %p660, %s37, 1
          %s662 = smul.addr %s661, 4
          %s663 = scalar_lea.vmem %s11, %s662
        $region80: #{bert_base_forward.1} parent=39 // pred_fallthru
          _
        // Predicated region
        $region81: #{bert_base_forward.1} parent=39 // pred_check
          %p664 = pneg %p363
        $region82: #{bert_base_forward.1} parent=39 // pred_check_branch
          %666 = sbr.rel (%p664) target = $region84
        $region83: #{bert_base_forward.1} parent=39 // pred_region
          %p667 = scmp.lt.s32.totalorder %s37, 1
          %s668 = scalar_select %p667, %s37, 1
          %s669 = smul.addr %s668, 64
          %s670 = smul.addr %s669, 4
          %s671 = scalar_lea.vmem %s12, %s670
        $region84: #{bert_base_forward.1} parent=39 // pred_fallthru
          _
        // Predicated region
        $region85: #{bert_base_forward.1} parent=39 // pred_check
          %p672 = pneg %p389
        $region86: #{bert_base_forward.1} parent=39 // pred_check_branch
          %674 = sbr.rel (%p672) target = $region88
        $region87: #{bert_base_forward.1} parent=39 // pred_region
          %p675 = scmp.lt.s32.totalorder %s37, 1
          %s676 = scalar_select %p675, %s37, 1
          %s677 = scalar_lea.vmem %s13, %s676
        $region88: #{bert_base_forward.1} parent=39 // pred_fallthru
          _
        // Predicated region
        $region89: #{bert_base_forward.1} parent=39 // pred_check
          %p678 = pneg %p415
        $region90: #{bert_base_forward.1} parent=39 // pred_check_branch
          %680 = sbr.rel (%p678) target = $region92
        $region91: #{bert_base_forward.1} parent=39 // pred_region
          %p681 = scmp.lt.s32.totalorder %s37, 1
          %s682 = scalar_select %p681, %s37, 1
          %s683 = scalar_lea.vmem %s14, %s682
        $region92: #{bert_base_forward.1} parent=39 // pred_fallthru
          _
        // Predicated region
        $region93: #{bert_base_forward.1} parent=39 // pred_check
          %p684 = pneg %p441
        $region94: #{bert_base_forward.1} parent=39 // pred_check_branch
          %686 = sbr.rel (%p684) target = $region96
        $region95: #{bert_base_forward.1} parent=39 // pred_region
          %p687 = scmp.lt.s32.totalorder %s37, 1
          %s688 = scalar_select %p687, %s37, 1
          %s689 = scalar_lea.vmem %s15, %s688
        $region96: #{bert_base_forward.1} parent=39 // pred_fallthru
          _
      $region40: #{bert_base_forward.1} parent=5 // pred_fallthru
        _
      %p690 = scmp.le.s32.totalorder 1, %s29
      %p691 = scmp.lt.s32.totalorder %s29, 5
      %p692 = pnand %p690, %p691
      %p693 = pneg %p692
      // Predicated region
      $region97: #{bert_base_forward.1} parent=5 // pred_check
        _
      $region98: #{bert_base_forward.1} parent=5 // pred_check_branch
        %695 = sbr.rel (%p692) target = $region100
      $region99: #{bert_base_forward.1} parent=5 // pred_region
        %s696 = ssub.s32 %s29, 1
        %p697 = scmp.lt.s32.totalorder %s38, 1
        %s698 = scalar_select %p697, %s38, 1
        %s699 = smul.addr %s698, 2
        %s700 = smul.addr %s699, 8
        %s701 = scalar_lea.vmem %s0, %s700
        %p702 = pneg %p67
        %p703 = pneg %p64
        %p704 = scmp.lt.s32.totalorder %s38, 1
        %s705 = scalar_select %p704, %s38, 1
        %s706 = scalar_lea.vmem %s1, %s705
        %p707 = pneg %p93
        %p708 = pneg %p90
        %p709 = pneg %p114
        %p710 = pneg %p111
        %p711 = pneg %p135
        %p712 = pneg %p132
        %p713 = scmp.lt.s32.totalorder %s39, 1
        %s714 = scalar_select %p713, %s39, 1
        %s715 = smul.addr %s714, 48
        %s716 = smul.addr %s715, 4
        %s717 = scalar_lea.vmem %s4, %s716
        %p718 = pneg %p161
        %p719 = pneg %p158
        %p720 = scmp.lt.s32.totalorder %s39, 1
        %s721 = scalar_select %p720, %s39, 1
        %s722 = smul.addr %s721, 3
        %s723 = scalar_lea.vmem %s5, %s722
        %p724 = pneg %p187
        %p725 = pneg %p184
        %p726 = scmp.lt.s32.totalorder %s39, 1
        %s727 = scalar_select %p726, %s39, 1
        %s728 = smul.addr %s727, 16
        %s729 = smul.addr %s728, 4
        %s730 = scalar_lea.vmem %s6, %s729
        %p731 = pneg %p213
        %p732 = pneg %p210
        %p733 = scmp.lt.s32.totalorder %s39, 1
        %s734 = scalar_select %p733, %s39, 1
        %s735 = scalar_lea.vmem %s7, %s734
        %p736 = pneg %p239
        %p737 = pneg %p236
        %p738 = scmp.lt.s32.totalorder %s39, 1
        %s739 = scalar_select %p738, %s39, 1
        %s740 = scalar_lea.vmem %s8, %s739
        %p741 = pneg %p265
        %p742 = pneg %p262
        %p743 = scmp.lt.s32.totalorder %s39, 1
        %s744 = scalar_select %p743, %s39, 1
        %s745 = scalar_lea.vmem %s9, %s744
        %p746 = pneg %p291
        %p747 = pneg %p288
        %p748 = scmp.lt.s32.totalorder %s39, 1
        %s749 = scalar_select %p748, %s39, 1
        %s750 = smul.addr %s749, 64
        %s751 = smul.addr %s750, 4
        %s752 = scalar_lea.vmem %s10, %s751
        %p753 = pneg %p317
        %p754 = pneg %p314
        %p755 = scmp.lt.s32.totalorder %s39, 1
        %s756 = scalar_select %p755, %s39, 1
        %s757 = smul.addr %s756, 4
        %s758 = scalar_lea.vmem %s11, %s757
        %p759 = pneg %p343
        %p760 = pneg %p340
        %p761 = scmp.lt.s32.totalorder %s39, 1
        %s762 = scalar_select %p761, %s39, 1
        %s763 = smul.addr %s762, 64
        %s764 = smul.addr %s763, 4
        %s765 = scalar_lea.vmem %s12, %s764
        %p766 = pneg %p369
        %p767 = pneg %p366
        %p768 = scmp.lt.s32.totalorder %s39, 1
        %s769 = scalar_select %p768, %s39, 1
        %s770 = scalar_lea.vmem %s13, %s769
        %p771 = pneg %p395
        %p772 = pneg %p392
        %p773 = scmp.lt.s32.totalorder %s39, 1
        %s774 = scalar_select %p773, %s39, 1
        %s775 = scalar_lea.vmem %s14, %s774
        %p776 = pneg %p421
        %p777 = pneg %p418
        %p778 = scmp.lt.s32.totalorder %s39, 1
        %s779 = scalar_select %p778, %s39, 1
        %s780 = scalar_lea.vmem %s15, %s779
        %p781 = pneg %p447
        %p782 = pneg %p444
        %p783 = pneg %p468
        %p784 = pneg %p465
        %p785 = pneg %p489
        %p786 = pneg %p486
        %p787 = pneg %p510
        %p788 = pneg %p507
        %p789 = pneg %p531
        %p790 = pneg %p528
        %p791 = pneg %p557
        %p792 = pneg %p554
        %s793 = sand.u32 %s544, 1
        %s794 = scalar_lea.sflag [#allocation4], %s793
        %s795 = sand.u32 %s544, 1
        %s796 = scalar_lea.vmem [#allocation3], %s795
        %p797 = scmp.lt.s32.totalorder %s38, 1
        %s798 = scalar_select %p797, %s38, 1
        %s799 = smul.addr %s798, 2
        %s800 = smul.addr %s799, 8
        %s801 = scalar_lea.vmem %s0, %s800
        %p802 = scmp.lt.s32.totalorder %s38, 1
        %s803 = scalar_select %p802, %s38, 1
        %s804 = scalar_lea.vmem %s1, %s803
        %p805 = scmp.lt.s32.totalorder %s39, 1
        %s806 = scalar_select %p805, %s39, 1
        %s807 = smul.addr %s806, 48
        %s808 = smul.addr %s807, 4
        %s809 = scalar_lea.vmem %s4, %s808
        %p810 = scmp.lt.s32.totalorder %s39, 1
        %s811 = scalar_select %p810, %s39, 1
        %s812 = smul.addr %s811, 3
        %s813 = scalar_lea.vmem %s5, %s812
        %p814 = scmp.lt.s32.totalorder %s39, 1
        %s815 = scalar_select %p814, %s39, 1
        %s816 = smul.addr %s815, 16
        %s817 = smul.addr %s816, 4
        %s818 = scalar_lea.vmem %s6, %s817
        %p819 = scmp.lt.s32.totalorder %s39, 1
        %s820 = scalar_select %p819, %s39, 1
        %s821 = scalar_lea.vmem %s7, %s820
        %p822 = scmp.lt.s32.totalorder %s39, 1
        %s823 = scalar_select %p822, %s39, 1
        %s824 = scalar_lea.vmem %s8, %s823
        %p825 = scmp.lt.s32.totalorder %s39, 1
        %s826 = scalar_select %p825, %s39, 1
        %s827 = scalar_lea.vmem %s9, %s826
        %p828 = scmp.lt.s32.totalorder %s39, 1
        %s829 = scalar_select %p828, %s39, 1
        %s830 = smul.addr %s829, 64
        %s831 = smul.addr %s830, 4
        %s832 = scalar_lea.vmem %s10, %s831
        %p833 = scmp.lt.s32.totalorder %s39, 1
        %s834 = scalar_select %p833, %s39, 1
        %s835 = smul.addr %s834, 4
        %s836 = scalar_lea.vmem %s11, %s835
        %p837 = scmp.lt.s32.totalorder %s39, 1
        %s838 = scalar_select %p837, %s39, 1
        %s839 = smul.addr %s838, 64
        %s840 = smul.addr %s839, 4
        %s841 = scalar_lea.vmem %s12, %s840
        %p842 = scmp.lt.s32.totalorder %s39, 1
        %s843 = scalar_select %p842, %s39, 1
        %s844 = scalar_lea.vmem %s13, %s843
        %p845 = scmp.lt.s32.totalorder %s39, 1
        %s846 = scalar_select %p845, %s39, 1
        %s847 = scalar_lea.vmem %s14, %s846
        %p848 = scmp.lt.s32.totalorder %s39, 1
        %s849 = scalar_select %p848, %s39, 1
        %s850 = scalar_lea.vmem %s15, %s849
        %p852 = scmp.eq.s32.totalorder %s39, 0
        // Predicated region
        $region101: #{bert_base_forward.1} parent=99 // pred_check
          %p853 = pneg %p852
        $region102: #{bert_base_forward.1} parent=99 // pred_check_branch
          %855 = sbr.rel (%p853) target = $region104
        $region103: #{bert_base_forward.1} parent=99 // pred_region
          %v856 = vld [vmem:[%s801] sm:$0xff]
          %v857 = vld [vmem:[%s801 + $0x8] sm:$0xff]
          %v858 = vld [vmem:[%s2] sm:$0x1]
          %v859 = vld [vmem:[%s3] sm:$0x1]
          %860 = vadd.xlane.f32.xlu0 %v856
          %v861 = vpop.xlane.xlu0 %860
          %862 = vadd.xlane.f32.xlu0 %v857
          %v863 = vpop.xlane.xlu0 %862
          %v864 = vrcp.pop 128.0
          %v865 = vmul.f32 %v861, %v864
          %v866 = vmul.f32 %v863, %v864
          %v867 = vsub.f32 %v856, %v865
          %v868 = vsub.f32 %v857, %v866
          %v869 = vmul.f32 %v867, %v867
          %v870 = vmul.f32 %v868, %v868
          %871 = vadd.xlane.f32.xlu0 %v869
          %v872 = vpop.xlane.xlu0 %871
          %873 = vadd.xlane.f32.xlu0 %v870
          %v874 = vpop.xlane.xlu0 %873
          %v875 = vmul.f32 %v872, %v864
          %v876 = vmul.f32 %v874, %v864
          %v877 = vadd.f32 %v875, 1e-12
          %v878 = vadd.f32 %v876, 1e-12
          %v879 = vrsqrt.pop %v877
          %v880 = vrsqrt.pop %v878
          %v881 = vmul.f32 %v867, %v879
          %v882 = vmul.f32 %v868, %v880
          %v884 = vlaneseq
          %v885 = vshrl.u32 %v884, 7
          %v886 = vsub.s32 0, %v885
          %v887 = vrot.slane %v858, %v886
          %v889 = vmul.f32 %v881, %v887
          %v890 = vmul.f32 %v882, %v887
          %v892 = vlaneseq
          %v893 = vshrl.u32 %v892, 7
          %v894 = vsub.s32 0, %v893
          %v895 = vrot.slane %v859, %v894
          %v897 = vadd.f32 %v889, %v895
          %v898 = vadd.f32 %v890, %v895
          %899 = vst [vmem:[#allocation2] sm:$0xff] %v897
          %900 = vst [vmem:[#allocation2 + $0x8] sm:$0xff] %v898
        $region104: #{bert_base_forward.1} parent=99 // pred_fallthru
          _
        %v901 = vld [vmem:[#allocation2] sm:$0xff]
        %v902 = vld [vmem:[#allocation2 + $0x8] sm:$0xff]
        %v903 = vpack.c.bf16 %v902, %v901
        %v904 = vld [vmem:[%s809] sm:$0xff]
        %v905 = vld [vmem:[%s809 + $0x8] sm:$0xf]
        %v906 = vld [vmem:[%s809 + $0xc] sm:$0xff]
        %v907 = vld [vmem:[%s809 + $0x14] sm:$0xf]
        %v908 = vld [vmem:[%s809 + $0x18] sm:$0xff]
        %v909 = vld [vmem:[%s809 + $0x20] sm:$0xf]
        %v910 = vld [vmem:[%s809 + $0x24] sm:$0xff]
        %v911 = vld [vmem:[%s809 + $0x2c] sm:$0xf]
        %v912 = vld [vmem:[%s809 + $0x30] sm:$0xff]
        %v913 = vld [vmem:[%s809 + $0x38] sm:$0xf]
        %v914 = vld [vmem:[%s809 + $0x3c] sm:$0xff]
        %v915 = vld [vmem:[%s809 + $0x44] sm:$0xf]
        %v916 = vld [vmem:[%s809 + $0x48] sm:$0xff]
        %v917 = vld [vmem:[%s809 + $0x50] sm:$0xf]
        %v918 = vld [vmem:[%s809 + $0x54] sm:$0xff]
        %v919 = vld [vmem:[%s809 + $0x5c] sm:$0xf]
        %v920 = vld [vmem:[%s809 + $0x60] sm:$0xff]
        %v921 = vld [vmem:[%s809 + $0x68] sm:$0xf]
        %v922 = vld [vmem:[%s809 + $0x6c] sm:$0xff]
        %v923 = vld [vmem:[%s809 + $0x74] sm:$0xf]
        %v924 = vld [vmem:[%s809 + $0x78] sm:$0xff]
        %v925 = vld [vmem:[%s809 + $0x80] sm:$0xf]
        %v926 = vld [vmem:[%s809 + $0x84] sm:$0xff]
        %v927 = vld [vmem:[%s809 + $0x8c] sm:$0xf]
        %v928 = vld [vmem:[%s809 + $0x90] sm:$0xff]
        %v929 = vld [vmem:[%s809 + $0x98] sm:$0xf]
        %v930 = vld [vmem:[%s809 + $0x9c] sm:$0xff]
        %v931 = vld [vmem:[%s809 + $0xa4] sm:$0xf]
        %v932 = vld [vmem:[%s809 + $0xa8] sm:$0xff]
        %v933 = vld [vmem:[%s809 + $0xb0] sm:$0xf]
        %v934 = vld [vmem:[%s809 + $0xb4] sm:$0xff]
        %v935 = vld [vmem:[%s809 + $0xbc] sm:$0xf]
        %v936 = vld [vmem:[%s813] sm:$0x7]
        %v938 = vlaneseq
        %v939 = vshrl.u32 %v938, 7
        %v940 = vsub.s32 0, %v939
        %v941 = vrot.slane %v936, %v940
        %v942 = vlaneseq
        %v943 = vshrl.u32 %v942, 7
        %v944 = vsub.s32 1, %v943
        %v945 = vrot.slane %v936, %v944
        %v946 = vlaneseq
        %v947 = vshrl.u32 %v946, 7
        %v948 = vsub.s32 2, %v947
        %v949 = vrot.slane %v936, %v948
        %v985 = vunpack.c.l.b16 %v904
        %v986 = vunpack.c.h.b16 %v904
        %v987 = vunpack.c.l.b16 %v905
        %v988 = vunpack.c.l.b16 %v906
        %v989 = vunpack.c.h.b16 %v906
        %v990 = vunpack.c.l.b16 %v907
        %v991 = vunpack.c.l.b16 %v908
        %v992 = vunpack.c.h.b16 %v908
        %v993 = vunpack.c.l.b16 %v909
        %v994 = vunpack.c.l.b16 %v910
        %v995 = vunpack.c.h.b16 %v910
        %v996 = vunpack.c.l.b16 %v911
        %v997 = vunpack.c.l.b16 %v912
        %v998 = vunpack.c.h.b16 %v912
        %v999 = vunpack.c.l.b16 %v913
        %v1000 = vunpack.c.l.b16 %v914
        %v1001 = vunpack.c.h.b16 %v914
        %v1002 = vunpack.c.l.b16 %v915
        %v1003 = vunpack.c.l.b16 %v916
        %v1004 = vunpack.c.h.b16 %v916
        %v1005 = vunpack.c.l.b16 %v917
        %v1006 = vunpack.c.l.b16 %v918
        %v1007 = vunpack.c.h.b16 %v918
        %v1008 = vunpack.c.l.b16 %v919
        %v1009 = vunpack.c.l.b16 %v920
        %v1010 = vunpack.c.h.b16 %v920
        %v1011 = vunpack.c.l.b16 %v921
        %v1012 = vunpack.c.l.b16 %v922
        %v1013 = vunpack.c.h.b16 %v922
        %v1014 = vunpack.c.l.b16 %v923
        %v1015 = vunpack.c.l.b16 %v924
        %v1016 = vunpack.c.h.b16 %v924
        %v1017 = vunpack.c.l.b16 %v925
        %v1018 = vunpack.c.l.b16 %v926
        %v1019 = vunpack.c.h.b16 %v926
        %v1020 = vunpack.c.l.b16 %v927
        %v1021 = vunpack.c.l.b16 %v928
        %v1022 = vunpack.c.h.b16 %v928
        %v1023 = vunpack.c.l.b16 %v929
        %v1024 = vunpack.c.l.b16 %v930
        %v1025 = vunpack.c.h.b16 %v930
        %v1026 = vunpack.c.l.b16 %v931
        %v1027 = vunpack.c.l.b16 %v932
        %v1028 = vunpack.c.h.b16 %v932
        %v1029 = vunpack.c.l.b16 %v933
        %v1030 = vunpack.c.l.b16 %v934
        %v1031 = vunpack.c.h.b16 %v934
        %v1032 = vunpack.c.l.b16 %v935
        %v1033 = vpack.c.b16 %v988, %v985
        %v1034 = vpack.c.b16 %v989, %v986
        %v1035 = vpack.c.b16 %v990, %v987
        %v1036 = vpack.c.b16 %v994, %v991
        %v1037 = vpack.c.b16 %v995, %v992
        %v1038 = vpack.c.b16 %v996, %v993
        %v1039 = vpack.c.b16 %v1000, %v997
        %v1040 = vpack.c.b16 %v1001, %v998
        %v1041 = vpack.c.b16 %v1002, %v999
        %v1042 = vpack.c.b16 %v1006, %v1003
        %v1043 = vpack.c.b16 %v1007, %v1004
        %v1044 = vpack.c.b16 %v1008, %v1005
        %v1045 = vpack.c.b16 %v1012, %v1009
        %v1046 = vpack.c.b16 %v1013, %v1010
        %v1047 = vpack.c.b16 %v1014, %v1011
        %v1048 = vpack.c.b16 %v1018, %v1015
        %v1049 = vpack.c.b16 %v1019, %v1016
        %v1050 = vpack.c.b16 %v1020, %v1017
        %v1051 = vpack.c.b16 %v1024, %v1021
        %v1052 = vpack.c.b16 %v1025, %v1022
        %v1053 = vpack.c.b16 %v1026, %v1023
        %v1054 = vpack.c.b16 %v1030, %v1027
        %v1055 = vpack.c.b16 %v1031, %v1028
        %v1056 = vpack.c.b16 %v1032, %v1029
        %1081 = vmatprep.subr.bf16.mxu0 %v1034
        %1082 = vmatpush1.bf16.msra.mxu0 %v1033
        %1083 = vmatprep.subr.bf16.mxu0 %v1037
        %1084 = vmatpush1.bf16.msra.mxu0 %v1036
        %1085 = vmatprep.subr.bf16.mxu0 %v1040
        %1086 = vmatpush1.bf16.msra.mxu0 %v1039
        %1087 = vmatprep.subr.bf16.mxu0 %v1043
        %1088 = vmatpush1.bf16.msra.mxu0 %v1042
        %1089 = vmatprep.subr.bf16.mxu0 %v1046
        %1090 = vmatpush1.bf16.msra.mxu0 %v1045
        %1091 = vmatprep.subr.bf16.mxu0 %v1049
        %1092 = vmatpush1.bf16.msra.mxu0 %v1048
        %1093 = vmatprep.subr.bf16.mxu0 %v1052
        %1094 = vmatpush1.bf16.msra.mxu0 %v1051
        %1095 = vmatprep.subr.bf16.mxu0 %v1055
        %1096 = vmatpush1.bf16.msra.mxu0 %v1054
        %1097 = vmatprep.subr.bf16.mxu0 0
        %1098 = vmatpush1.bf16.msra.mxu0 0
        %1099 = vmatprep.subr.bf16.mxu0 0
        %1100 = vmatpush1.bf16.msra.mxu0 0
        %1101 = vmatprep.subr.bf16.mxu0 0
        %1102 = vmatpush1.bf16.msra.mxu0 0
        %1103 = vmatprep.subr.bf16.mxu0 0
        %1104 = vmatpush1.bf16.msra.mxu0 0
        %1105 = vmatprep.subr.bf16.mxu0 0
        %1106 = vmatpush1.bf16.msra.mxu0 0
        %1107 = vmatprep.subr.bf16.mxu0 0
        %1108 = vmatpush1.bf16.msra.mxu0 0
        %1109 = vmatprep.subr.bf16.mxu0 0
        %1110 = vmatpush1.bf16.msra.mxu0 0
        %1111 = vmatprep.subr.bf16.mxu0 0
        %1112 = vmatpush1.bf16.msra.mxu0 0
        %1113 = vmatprep.mubr.bf16.mxu0 0
        %1114 = vmatmul.mubr.bf16.gmra.mrb[0].mxu0 %v903
        %v1115 = vpop.f32.mrb[0].mxu0
        %v1116 = vadd.f32 %v941, %v1115
        %v1117 = vpop.f32.mrb[0].mxu0
        %v1118 = vadd.f32 %v945, %v1117
        %v1119 = vpop.f32.mrb[0].mxu0
        %v1120 = vadd.f32 %v941, %v1119
        %v1121 = vpop.f32.mrb[0].mxu0
        %v1122 = vadd.f32 %v945, %v1121
        %1123 = vdwg.mxu0
        %1124 = vmatprep.subr.bf16.mxu0 0
        %1125 = vmatpush1.bf16.msra.mxu0 %v1035
        %1126 = vmatprep.subr.bf16.mxu0 0
        %1127 = vmatpush1.bf16.msra.mxu0 %v1038
        %1128 = vmatprep.subr.bf16.mxu0 0
        %1129 = vmatpush1.bf16.msra.mxu0 %v1041
        %1130 = vmatprep.subr.bf16.mxu0 0
        %1131 = vmatpush1.bf16.msra.mxu0 %v1044
        %1132 = vmatprep.subr.bf16.mxu0 0
        %1133 = vmatpush1.bf16.msra.mxu0 %v1047
        %1134 = vmatprep.subr.bf16.mxu0 0
        %1135 = vmatpush1.bf16.msra.mxu0 %v1050
        %1136 = vmatprep.subr.bf16.mxu0 0
        %1137 = vmatpush1.bf16.msra.mxu0 %v1053
        %1138 = vmatprep.subr.bf16.mxu0 0
        %1139 = vmatpush1.bf16.msra.mxu0 %v1056
        %1140 = vmatprep.subr.bf16.mxu0 0
        %1141 = vmatpush1.bf16.msra.mxu0 0
        %1142 = vmatprep.subr.bf16.mxu0 0
        %1143 = vmatpush1.bf16.msra.mxu0 0
        %1144 = vmatprep.subr.bf16.mxu0 0
        %1145 = vmatpush1.bf16.msra.mxu0 0
        %1146 = vmatprep.subr.bf16.mxu0 0
        %1147 = vmatpush1.bf16.msra.mxu0 0
        %1148 = vmatprep.subr.bf16.mxu0 0
        %1149 = vmatpush1.bf16.msra.mxu0 0
        %1150 = vmatprep.subr.bf16.mxu0 0
        %1151 = vmatpush1.bf16.msra.mxu0 0
        %1152 = vmatprep.subr.bf16.mxu0 0
        %1153 = vmatpush1.bf16.msra.mxu0 0
        %1154 = vmatprep.subr.bf16.mxu0 0
        %1155 = vmatpush1.bf16.msra.mxu0 0
        %1156 = vmatprep.mubr.bf16.mxu0 0
        %1157 = vmatmul.mubr.bf16.gmra.mrb[0].mxu0 %v903
        %v1158 = vpop.f32.mrb[0].mxu0
        %v1159 = vadd.f32 %v949, %v1158
        %v1160 = vpop.f32.mrb[0].mxu0
        %v1161 = vpop.f32.mrb[0].mxu0
        %v1162 = vadd.f32 %v949, %v1161
        %v1163 = vpop.f32.mrb[0].mxu0
        %1164 = vdwg.mxu0
        %v1165 = vld [vmem:[%s804] sm:$0x1]
        %v1167 = vlaneseq
        %v1168 = vshrl.u32 %v1167, 7
        %v1169 = vsub.s32 0, %v1168
        %v1170 = vrot.slane %v1165, %v1169
        %v1172 = vld [vmem:[%s818] sm:$0xf]
        %v1173 = vld [vmem:[%s818 + $0x4] sm:$0xf]
        %v1174 = vld [vmem:[%s818 + $0x8] sm:$0xf]
        %v1175 = vld [vmem:[%s818 + $0xc] sm:$0xf]
        %v1176 = vld [vmem:[%s818 + $0x10] sm:$0xf]
        %v1177 = vld [vmem:[%s818 + $0x14] sm:$0xf]
        %v1178 = vld [vmem:[%s818 + $0x18] sm:$0xf]
        %v1179 = vld [vmem:[%s818 + $0x1c] sm:$0xf]
        %v1180 = vld [vmem:[%s818 + $0x20] sm:$0xf]
        %v1181 = vld [vmem:[%s818 + $0x24] sm:$0xf]
        %v1182 = vld [vmem:[%s818 + $0x28] sm:$0xf]
        %v1183 = vld [vmem:[%s818 + $0x2c] sm:$0xf]
        %v1184 = vld [vmem:[%s818 + $0x30] sm:$0xf]
        %v1185 = vld [vmem:[%s818 + $0x34] sm:$0xf]
        %v1186 = vld [vmem:[%s818 + $0x38] sm:$0xf]
        %v1187 = vld [vmem:[%s818 + $0x3c] sm:$0xf]
        %v1188 = vpack.c.bf16 %v1120, %v1116
        %v1189 = vpack.c.bf16 %v1122, %v1118
        %v1190 = vpack.c.bf16 %v1162, %v1159
        %vm1191 = vcmask 523264
        %v1193 = vsel %vm1191, %v1188, 0
        %v1196 = vsel %vm1191, %v1189, 0
        %1198 = vmatprep.subr.bf16.mxu0 0
        %1199 = vmatpush1.bf16.xpose.msra.mxu0 %v1196
        %1200 = vmatprep.subr.bf16.mxu0 0
        %1201 = vmatpush1.bf16.xpose.msra.mxu0 0
        %1202 = vmatprep.subr.bf16.mxu0 0
        %1203 = vmatpush1.bf16.xpose.msra.mxu0 0
        %1204 = vmatprep.subr.bf16.mxu0 0
        %1205 = vmatpush1.bf16.xpose.msra.mxu0 0
        %1206 = vmatprep.subr.bf16.mxu0 0
        %1207 = vmatpush1.bf16.xpose.msra.mxu0 0
        %1208 = vmatprep.subr.bf16.mxu0 0
        %1209 = vmatpush1.bf16.xpose.msra.mxu0 0
        %1210 = vmatprep.subr.bf16.mxu0 0
        %1211 = vmatpush1.bf16.xpose.msra.mxu0 0
        %1212 = vmatprep.subr.bf16.mxu0 0
        %1213 = vmatpush1.bf16.xpose.msra.mxu0 0
        %1214 = vmatprep.subr.bf16.mxu0 0
        %1215 = vmatpush1.bf16.xpose.msra.mxu0 0
        %1216 = vmatprep.subr.bf16.mxu0 0
        %1217 = vmatpush1.bf16.xpose.msra.mxu0 0
        %1218 = vmatprep.subr.bf16.mxu0 0
        %1219 = vmatpush1.bf16.xpose.msra.mxu0 0
        %1220 = vmatprep.subr.bf16.mxu0 0
        %1221 = vmatpush1.bf16.xpose.msra.mxu0 0
        %1222 = vmatprep.subr.bf16.mxu0 0
        %1223 = vmatpush1.bf16.xpose.msra.mxu0 0
        %1224 = vmatprep.subr.bf16.mxu0 0
        %1225 = vmatpush1.bf16.xpose.msra.mxu0 0
        %1226 = vmatprep.subr.bf16.mxu0 0
        %1227 = vmatpush1.bf16.xpose.msra.mxu0 0
        %1228 = vmatprep.subr.bf16.mxu0 0
        %1229 = vmatpush1.bf16.xpose.msra.mxu0 0
        %1230 = vmatprep.mubr.bf16.mxu0 0
        %1231 = vmatmul.mubr.bf16.gmra.mrb[0].mxu0 %v1193
        %v1232 = vpop.f32.mrb[0].mxu0
        %v1233 = vadd.f32 %v1170, %v1232
        %v1234 = vpop.f32.mrb[0].mxu0
        %v1235 = vpop.f32.mrb[0].mxu0
        %v1236 = vadd.f32 %v1170, %v1235
        %v1237 = vpop.f32.mrb[0].mxu0
        %1238 = vdwg.mxu0
        %vm1239 = vcmask 130048
        %v1240 = vsel %vm1239, %v1233, -inf
        %1241 = vmax.xlane.f32.xlu0 %v1240
        %v1242 = vpop.xlane.xlu0 %1241
        %v1243 = vsel %vm1239, %v1236, -inf
        %1244 = vmax.xlane.f32.xlu0 %v1243
        %v1245 = vpop.xlane.xlu0 %1244
        %v1246 = vsub.f32 %v1233, %v1242
        %v1247 = vsub.f32 %v1236, %v1245
        %v1248 = vmul.f32 %v1246, 1.442695
        %v1249 = vpow.pop %v1248
        %v1250 = vmul.f32 %v1247, 1.442695
        %v1251 = vpow.pop %v1250
        %v1252 = vsel %vm1239, %v1249, 0.0
        %1253 = vadd.xlane.f32.xlu0 %v1252
        %v1254 = vpop.xlane.xlu0 %1253
        %v1255 = vsel %vm1239, %v1251, 0.0
        %1256 = vadd.xlane.f32.xlu0 %v1255
        %v1257 = vpop.xlane.xlu0 %1256
        %v1258 = vrcp.pop %v1254
        %v1259 = vrcp.pop %v1257
        %v1260 = vmul.f32 %v1249, %v1258
        %v1261 = vmul.f32 %v1251, %v1259
        %v1262 = vpack.c.bf16 %v1261, %v1260
        %v1264 = vsel %vm1239, %v1262, 0
        %1266 = vmatprep.subr.bf16.mxu0 0
        %1267 = vmatpush1.bf16.msra.mxu0 %v1190
        %1268 = vmatprep.subr.bf16.mxu0 0
        %1269 = vmatpush1.bf16.msra.mxu0 0
        %1270 = vmatprep.subr.bf16.mxu0 0
        %1271 = vmatpush1.bf16.msra.mxu0 0
        %1272 = vmatprep.subr.bf16.mxu0 0
        %1273 = vmatpush1.bf16.msra.mxu0 0
        %1274 = vmatprep.subr.bf16.mxu0 0
        %1275 = vmatpush1.bf16.msra.mxu0 0
        %1276 = vmatprep.subr.bf16.mxu0 0
        %1277 = vmatpush1.bf16.msra.mxu0 0
        %1278 = vmatprep.subr.bf16.mxu0 0
        %1279 = vmatpush1.bf16.msra.mxu0 0
        %1280 = vmatprep.subr.bf16.mxu0 0
        %1281 = vmatpush1.bf16.msra.mxu0 0
        %1282 = vmatprep.subr.bf16.mxu0 0
        %1283 = vmatpush1.bf16.msra.mxu0 0
        %1284 = vmatprep.subr.bf16.mxu0 0
        %1285 = vmatpush1.bf16.msra.mxu0 0
        %1286 = vmatprep.subr.bf16.mxu0 0
        %1287 = vmatpush1.bf16.msra.mxu0 0
        %1288 = vmatprep.subr.bf16.mxu0 0
        %1289 = vmatpush1.bf16.msra.mxu0 0
        %1290 = vmatprep.subr.bf16.mxu0 0
        %1291 = vmatpush1.bf16.msra.mxu0 0
        %1292 = vmatprep.subr.bf16.mxu0 0
        %1293 = vmatpush1.bf16.msra.mxu0 0
        %1294 = vmatprep.subr.bf16.mxu0 0
        %1295 = vmatpush1.bf16.msra.mxu0 0
        %1296 = vmatprep.subr.bf16.mxu0 0
        %1297 = vmatpush1.bf16.msra.mxu0 0
        %1298 = vmatprep.mubr.bf16.mxu0 0
        %1299 = vmatmul.mubr.bf16.gmra.mrb[0].mxu0 %v1264
        %v1300 = vpop.f32.mrb[0].mxu0
        %v1301 = vadd.f32 0.0, %v1300
        %v1302 = vpop.f32.mrb[0].mxu0
        %v1303 = vpop.f32.mrb[0].mxu0
        %v1304 = vadd.f32 0.0, %v1303
        %v1305 = vpop.f32.mrb[0].mxu0
        %1306 = vdwg.mxu0
        %v1307 = vpack.c.bf16 %v1304, %v1301
        %1309 = vrot.lane.b32.xlu0 %v1188, 64
        %v1310 = vpop.permute.xlu0 %1309
        %1312 = vrot.lane.b32.xlu0 %v1189, 64
        %v1313 = vpop.permute.xlu0 %1312
        %v1315 = vsel %vm1191, %v1310, 0
        %v1318 = vsel %vm1191, %v1313, 0
        %1320 = vmatprep.subr.bf16.mxu0 0
        %1321 = vmatpush1.bf16.xpose.msra.mxu0 %v1318
        %1322 = vmatprep.subr.bf16.mxu0 0
        %1323 = vmatpush1.bf16.xpose.msra.mxu0 0
        %1324 = vmatprep.subr.bf16.mxu0 0
        %1325 = vmatpush1.bf16.xpose.msra.mxu0 0
        %1326 = vmatprep.subr.bf16.mxu0 0
        %1327 = vmatpush1.bf16.xpose.msra.mxu0 0
        %1328 = vmatprep.subr.bf16.mxu0 0
        %1329 = vmatpush1.bf16.xpose.msra.mxu0 0
        %1330 = vmatprep.subr.bf16.mxu0 0
        %1331 = vmatpush1.bf16.xpose.msra.mxu0 0
        %1332 = vmatprep.subr.bf16.mxu0 0
        %1333 = vmatpush1.bf16.xpose.msra.mxu0 0
        %1334 = vmatprep.subr.bf16.mxu0 0
        %1335 = vmatpush1.bf16.xpose.msra.mxu0 0
        %1336 = vmatprep.subr.bf16.mxu0 0
        %1337 = vmatpush1.bf16.xpose.msra.mxu0 0
        %1338 = vmatprep.subr.bf16.mxu0 0
        %1339 = vmatpush1.bf16.xpose.msra.mxu0 0
        %1340 = vmatprep.subr.bf16.mxu0 0
        %1341 = vmatpush1.bf16.xpose.msra.mxu0 0
        %1342 = vmatprep.subr.bf16.mxu0 0
        %1343 = vmatpush1.bf16.xpose.msra.mxu0 0
        %1344 = vmatprep.subr.bf16.mxu0 0
        %1345 = vmatpush1.bf16.xpose.msra.mxu0 0
        %1346 = vmatprep.subr.bf16.mxu0 0
        %1347 = vmatpush1.bf16.xpose.msra.mxu0 0
        %1348 = vmatprep.subr.bf16.mxu0 0
        %1349 = vmatpush1.bf16.xpose.msra.mxu0 0
        %1350 = vmatprep.subr.bf16.mxu0 0
        %1351 = vmatpush1.bf16.xpose.msra.mxu0 0
        %1352 = vmatprep.mubr.bf16.mxu0 0
        %1353 = vmatmul.mubr.bf16.gmra.mrb[0].mxu0 %v1315
        %v1354 = vpop.f32.mrb[0].mxu0
        %v1355 = vadd.f32 %v1170, %v1354
        %v1356 = vpop.f32.mrb[0].mxu0
        %v1357 = vpop.f32.mrb[0].mxu0
        %v1358 = vadd.f32 %v1170, %v1357
        %v1359 = vpop.f32.mrb[0].mxu0
        %1360 = vdwg.mxu0
        %v1361 = vsel %vm1239, %v1355, -inf
        %1362 = vmax.xlane.f32.xlu0 %v1361
        %v1363 = vpop.xlane.xlu0 %1362
        %v1364 = vsel %vm1239, %v1358, -inf
        %1365 = vmax.xlane.f32.xlu0 %v1364
        %v1366 = vpop.xlane.xlu0 %1365
        %v1367 = vsub.f32 %v1355, %v1363
        %v1368 = vsub.f32 %v1358, %v1366
        %v1369 = vmul.f32 %v1367, 1.442695
        %v1370 = vpow.pop %v1369
        %v1371 = vmul.f32 %v1368, 1.442695
        %v1372 = vpow.pop %v1371
        %v1373 = vsel %vm1239, %v1370, 0.0
        %1374 = vadd.xlane.f32.xlu0 %v1373
        %v1375 = vpop.xlane.xlu0 %1374
        %v1376 = vsel %vm1239, %v1372, 0.0
        %1377 = vadd.xlane.f32.xlu0 %v1376
        %v1378 = vpop.xlane.xlu0 %1377
        %v1379 = vrcp.pop %v1375
        %v1380 = vrcp.pop %v1378
        %v1381 = vmul.f32 %v1370, %v1379
        %v1382 = vmul.f32 %v1372, %v1380
        %v1383 = vpack.c.bf16 %v1382, %v1381
        %1385 = vrot.lane.b32.xlu0 %v1190, 64
        %v1386 = vpop.permute.xlu0 %1385
        %v1389 = vsel %vm1239, %v1383, 0
        %1391 = vmatprep.subr.bf16.mxu0 0
        %1392 = vmatpush1.bf16.msra.mxu0 %v1386
        %1393 = vmatprep.subr.bf16.mxu0 0
        %1394 = vmatpush1.bf16.msra.mxu0 0
        %1395 = vmatprep.subr.bf16.mxu0 0
        %1396 = vmatpush1.bf16.msra.mxu0 0
        %1397 = vmatprep.subr.bf16.mxu0 0
        %1398 = vmatpush1.bf16.msra.mxu0 0
        %1399 = vmatprep.subr.bf16.mxu0 0
        %1400 = vmatpush1.bf16.msra.mxu0 0
        %1401 = vmatprep.subr.bf16.mxu0 0
        %1402 = vmatpush1.bf16.msra.mxu0 0
        %1403 = vmatprep.subr.bf16.mxu0 0
        %1404 = vmatpush1.bf16.msra.mxu0 0
        %1405 = vmatprep.subr.bf16.mxu0 0
        %1406 = vmatpush1.bf16.msra.mxu0 0
        %1407 = vmatprep.subr.bf16.mxu0 0
        %1408 = vmatpush1.bf16.msra.mxu0 0
        %1409 = vmatprep.subr.bf16.mxu0 0
        %1410 = vmatpush1.bf16.msra.mxu0 0
        %1411 = vmatprep.subr.bf16.mxu0 0
        %1412 = vmatpush1.bf16.msra.mxu0 0
        %1413 = vmatprep.subr.bf16.mxu0 0
        %1414 = vmatpush1.bf16.msra.mxu0 0
        %1415 = vmatprep.subr.bf16.mxu0 0
        %1416 = vmatpush1.bf16.msra.mxu0 0
        %1417 = vmatprep.subr.bf16.mxu0 0
        %1418 = vmatpush1.bf16.msra.mxu0 0
        %1419 = vmatprep.subr.bf16.mxu0 0
        %1420 = vmatpush1.bf16.msra.mxu0 0
        %1421 = vmatprep.subr.bf16.mxu0 0
        %1422 = vmatpush1.bf16.msra.mxu0 0
        %1423 = vmatprep.mubr.bf16.mxu0 0
        %1424 = vmatmul.mubr.bf16.gmra.mrb[0].mxu0 %v1389
        %v1425 = vpop.f32.mrb[0].mxu0
        %v1426 = vadd.f32 0.0, %v1425
        %v1427 = vpop.f32.mrb[0].mxu0
        %v1428 = vpop.f32.mrb[0].mxu0
        %v1429 = vadd.f32 0.0, %v1428
        %v1430 = vpop.f32.mrb[0].mxu0
        %1431 = vdwg.mxu0
        %v1432 = vpack.c.bf16 %v1429, %v1426
        %v1441 = vunpack.c.l.b16 %v1180
        %v1442 = vunpack.c.l.b16 %v1181
        %v1443 = vunpack.c.l.b16 %v1182
        %v1444 = vunpack.c.l.b16 %v1183
        %v1445 = vunpack.c.l.b16 %v1184
        %v1446 = vunpack.c.l.b16 %v1185
        %v1447 = vunpack.c.l.b16 %v1186
        %v1448 = vunpack.c.l.b16 %v1187
        %v1449 = vpack.c.b16 %v1442, %v1441
        %v1450 = vpack.c.b16 %v1444, %v1443
        %v1451 = vpack.c.b16 %v1446, %v1445
        %v1452 = vpack.c.b16 %v1448, %v1447
        %v1458 = vsel %vm1191, %v1432, 0
        %1460 = vmatprep.subr.bf16.mxu0 0
        %1461 = vmatpush1.bf16.msra.mxu0 %v1449
        %1462 = vmatprep.subr.bf16.mxu0 0
        %1463 = vmatpush1.bf16.msra.mxu0 %v1450
        %1464 = vmatprep.subr.bf16.mxu0 0
        %1465 = vmatpush1.bf16.msra.mxu0 %v1451
        %1466 = vmatprep.subr.bf16.mxu0 0
        %1467 = vmatpush1.bf16.msra.mxu0 %v1452
        %1468 = vmatprep.subr.bf16.mxu0 0
        %1469 = vmatpush1.bf16.msra.mxu0 0
        %1470 = vmatprep.subr.bf16.mxu0 0
        %1471 = vmatpush1.bf16.msra.mxu0 0
        %1472 = vmatprep.subr.bf16.mxu0 0
        %1473 = vmatpush1.bf16.msra.mxu0 0
        %1474 = vmatprep.subr.bf16.mxu0 0
        %1475 = vmatpush1.bf16.msra.mxu0 0
        %1476 = vmatprep.subr.bf16.mxu0 0
        %1477 = vmatpush1.bf16.msra.mxu0 0
        %1478 = vmatprep.subr.bf16.mxu0 0
        %1479 = vmatpush1.bf16.msra.mxu0 0
        %1480 = vmatprep.subr.bf16.mxu0 0
        %1481 = vmatpush1.bf16.msra.mxu0 0
        %1482 = vmatprep.subr.bf16.mxu0 0
        %1483 = vmatpush1.bf16.msra.mxu0 0
        %1484 = vmatprep.subr.bf16.mxu0 0
        %1485 = vmatpush1.bf16.msra.mxu0 0
        %1486 = vmatprep.subr.bf16.mxu0 0
        %1487 = vmatpush1.bf16.msra.mxu0 0
        %1488 = vmatprep.subr.bf16.mxu0 0
        %1489 = vmatpush1.bf16.msra.mxu0 0
        %1490 = vmatprep.subr.bf16.mxu0 0
        %1491 = vmatpush1.bf16.msra.mxu0 0
        %1492 = vmatprep.mubr.bf16.mxu0 0
        %1493 = vmatmul.mubr.bf16.gmra.mrb[0].mxu0 %v1458
        %v1494 = vpop.f32.mrb[0].mxu0
        %v1495 = vadd.f32 0.0, %v1494
        %v1496 = vpop.f32.mrb[0].mxu0
        %v1497 = vpop.f32.mrb[0].mxu0
        %v1498 = vadd.f32 0.0, %v1497
        %v1499 = vpop.f32.mrb[0].mxu0
        %1500 = vdwg.mxu0
        %v1509 = vunpack.c.l.b16 %v1172
        %v1510 = vunpack.c.l.b16 %v1173
        %v1511 = vunpack.c.l.b16 %v1174
        %v1512 = vunpack.c.l.b16 %v1175
        %v1513 = vunpack.c.l.b16 %v1176
        %v1514 = vunpack.c.l.b16 %v1177
        %v1515 = vunpack.c.l.b16 %v1178
        %v1516 = vunpack.c.l.b16 %v1179
        %v1517 = vpack.c.b16 %v1510, %v1509
        %v1518 = vpack.c.b16 %v1512, %v1511
        %v1519 = vpack.c.b16 %v1514, %v1513
        %v1520 = vpack.c.b16 %v1516, %v1515
        %v1526 = vsel %vm1191, %v1307, 0
        %1528 = vmatprep.subr.bf16.mxu0 0
        %1529 = vmatpush1.bf16.msra.mxu0 %v1517
        %1530 = vmatprep.subr.bf16.mxu0 0
        %1531 = vmatpush1.bf16.msra.mxu0 %v1518
        %1532 = vmatprep.subr.bf16.mxu0 0
        %1533 = vmatpush1.bf16.msra.mxu0 %v1519
        %1534 = vmatprep.subr.bf16.mxu0 0
        %1535 = vmatpush1.bf16.msra.mxu0 %v1520
        %1536 = vmatprep.subr.bf16.mxu0 0
        %1537 = vmatpush1.bf16.msra.mxu0 0
        %1538 = vmatprep.subr.bf16.mxu0 0
        %1539 = vmatpush1.bf16.msra.mxu0 0
        %1540 = vmatprep.subr.bf16.mxu0 0
        %1541 = vmatpush1.bf16.msra.mxu0 0
        %1542 = vmatprep.subr.bf16.mxu0 0
        %1543 = vmatpush1.bf16.msra.mxu0 0
        %1544 = vmatprep.subr.bf16.mxu0 0
        %1545 = vmatpush1.bf16.msra.mxu0 0
        %1546 = vmatprep.subr.bf16.mxu0 0
        %1547 = vmatpush1.bf16.msra.mxu0 0
        %1548 = vmatprep.subr.bf16.mxu0 0
        %1549 = vmatpush1.bf16.msra.mxu0 0
        %1550 = vmatprep.subr.bf16.mxu0 0
        %1551 = vmatpush1.bf16.msra.mxu0 0
        %1552 = vmatprep.subr.bf16.mxu0 0
        %1553 = vmatpush1.bf16.msra.mxu0 0
        %1554 = vmatprep.subr.bf16.mxu0 0
        %1555 = vmatpush1.bf16.msra.mxu0 0
        %1556 = vmatprep.subr.bf16.mxu0 0
        %1557 = vmatpush1.bf16.msra.mxu0 0
        %1558 = vmatprep.subr.bf16.mxu0 0
        %1559 = vmatpush1.bf16.msra.mxu0 0
        %1560 = vmatprep.mubr.bf16.mxu0 0
        %1561 = vmatmul.mubr.bf16.gmra.mrb[0].mxu0 %v1526
        %v1562 = vpop.f32.mrb[0].mxu0
        %v1563 = vadd.f32 %v1495, %v1562
        %v1564 = vpop.f32.mrb[0].mxu0
        %v1565 = vpop.f32.mrb[0].mxu0
        %v1566 = vadd.f32 %v1498, %v1565
        %v1567 = vpop.f32.mrb[0].mxu0
        %1568 = vdwg.mxu0
        %v1569 = vld [vmem:[%s821] sm:$0x1]
        %v1571 = vlaneseq
        %v1572 = vshrl.u32 %v1571, 7
        %v1573 = vsub.s32 0, %v1572
        %v1574 = vrot.slane %v1569, %v1573
        %v1576 = vadd.f32 %v1563, %v1574
        %v1577 = vadd.f32 %v1566, %v1574
        %v1578 = vadd.f32 %v1576, %v901
        %v1579 = vadd.f32 %v1577, %v902
        %v1580 = vld [vmem:[%s824] sm:$0x1]
        %v1581 = vld [vmem:[%s827] sm:$0x1]
        %1582 = vadd.xlane.f32.xlu0 %v1578
        %v1583 = vpop.xlane.xlu0 %1582
        %1584 = vadd.xlane.f32.xlu0 %v1579
        %v1585 = vpop.xlane.xlu0 %1584
        %v1586 = vrcp.pop 128.0
        %v1587 = vmul.f32 %v1583, %v1586
        %v1588 = vmul.f32 %v1585, %v1586
        %v1589 = vsub.f32 %v1578, %v1587
        %v1590 = vsub.f32 %v1579, %v1588
        %v1591 = vmul.f32 %v1589, %v1589
        %v1592 = vmul.f32 %v1590, %v1590
        %1593 = vadd.xlane.f32.xlu0 %v1591
        %v1594 = vpop.xlane.xlu0 %1593
        %1595 = vadd.xlane.f32.xlu0 %v1592
        %v1596 = vpop.xlane.xlu0 %1595
        %v1597 = vmul.f32 %v1594, %v1586
        %v1598 = vmul.f32 %v1596, %v1586
        %v1599 = vadd.f32 %v1597, 1e-12
        %v1600 = vadd.f32 %v1598, 1e-12
        %v1601 = vrsqrt.pop %v1599
        %v1602 = vrsqrt.pop %v1600
        %v1603 = vmul.f32 %v1589, %v1601
        %v1604 = vmul.f32 %v1590, %v1602
        %v1606 = vlaneseq
        %v1607 = vshrl.u32 %v1606, 7
        %v1608 = vsub.s32 0, %v1607
        %v1609 = vrot.slane %v1580, %v1608
        %v1611 = vmul.f32 %v1603, %v1609
        %v1612 = vmul.f32 %v1604, %v1609
        %v1614 = vlaneseq
        %v1615 = vshrl.u32 %v1614, 7
        %v1616 = vsub.s32 0, %v1615
        %v1617 = vrot.slane %v1581, %v1616
        %v1619 = vadd.f32 %v1611, %v1617
        %v1620 = vadd.f32 %v1612, %v1617
        %v1621 = vpack.c.bf16 %v1620, %v1619
        %v1622 = vld [vmem:[%s832] sm:$0xff]
        %v1623 = vld [vmem:[%s832 + $0x8] sm:$0xff]
        %v1624 = vld [vmem:[%s832 + $0x10] sm:$0xff]
        %v1625 = vld [vmem:[%s832 + $0x18] sm:$0xff]
        %v1626 = vld [vmem:[%s832 + $0x20] sm:$0xff]
        %v1627 = vld [vmem:[%s832 + $0x28] sm:$0xff]
        %v1628 = vld [vmem:[%s832 + $0x30] sm:$0xff]
        %v1629 = vld [vmem:[%s832 + $0x38] sm:$0xff]
        %v1630 = vld [vmem:[%s832 + $0x40] sm:$0xff]
        %v1631 = vld [vmem:[%s832 + $0x48] sm:$0xff]
        %v1632 = vld [vmem:[%s832 + $0x50] sm:$0xff]
        %v1633 = vld [vmem:[%s832 + $0x58] sm:$0xff]
        %v1634 = vld [vmem:[%s832 + $0x60] sm:$0xff]
        %v1635 = vld [vmem:[%s832 + $0x68] sm:$0xff]
        %v1636 = vld [vmem:[%s832 + $0x70] sm:$0xff]
        %v1637 = vld [vmem:[%s832 + $0x78] sm:$0xff]
        %v1638 = vld [vmem:[%s832 + $0x80] sm:$0xff]
        %v1639 = vld [vmem:[%s832 + $0x88] sm:$0xff]
        %v1640 = vld [vmem:[%s832 + $0x90] sm:$0xff]
        %v1641 = vld [vmem:[%s832 + $0x98] sm:$0xff]
        %v1642 = vld [vmem:[%s832 + $0xa0] sm:$0xff]
        %v1643 = vld [vmem:[%s832 + $0xa8] sm:$0xff]
        %v1644 = vld [vmem:[%s832 + $0xb0] sm:$0xff]
        %v1645 = vld [vmem:[%s832 + $0xb8] sm:$0xff]
        %v1646 = vld [vmem:[%s832 + $0xc0] sm:$0xff]
        %v1647 = vld [vmem:[%s832 + $0xc8] sm:$0xff]
        %v1648 = vld [vmem:[%s832 + $0xd0] sm:$0xff]
        %v1649 = vld [vmem:[%s832 + $0xd8] sm:$0xff]
        %v1650 = vld [vmem:[%s832 + $0xe0] sm:$0xff]
        %v1651 = vld [vmem:[%s832 + $0xe8] sm:$0xff]
        %v1652 = vld [vmem:[%s832 + $0xf0] sm:$0xff]
        %v1653 = vld [vmem:[%s832 + $0xf8] sm:$0xff]
        %v1654 = vld [vmem:[%s836] sm:$0xf]
        %v1656 = vlaneseq
        %v1657 = vshrl.u32 %v1656, 7
        %v1658 = vsub.s32 0, %v1657
        %v1659 = vrot.slane %v1654, %v1658
        %v1660 = vlaneseq
        %v1661 = vshrl.u32 %v1660, 7
        %v1662 = vsub.s32 1, %v1661
        %v1663 = vrot.slane %v1654, %v1662
        %v1664 = vlaneseq
        %v1665 = vshrl.u32 %v1664, 7
        %v1666 = vsub.s32 2, %v1665
        %v1667 = vrot.slane %v1654, %v1666
        %v1668 = vlaneseq
        %v1669 = vshrl.u32 %v1668, 7
        %v1670 = vsub.s32 3, %v1669
        %v1671 = vrot.slane %v1654, %v1670
        %v1708 = vunpack.c.l.b16 %v1622
        %v1709 = vunpack.c.h.b16 %v1622
        %v1710 = vunpack.c.l.b16 %v1623
        %v1711 = vunpack.c.h.b16 %v1623
        %v1712 = vunpack.c.l.b16 %v1624
        %v1713 = vunpack.c.h.b16 %v1624
        %v1714 = vunpack.c.l.b16 %v1625
        %v1715 = vunpack.c.h.b16 %v1625
        %v1716 = vunpack.c.l.b16 %v1626
        %v1717 = vunpack.c.h.b16 %v1626
        %v1718 = vunpack.c.l.b16 %v1627
        %v1719 = vunpack.c.h.b16 %v1627
        %v1720 = vunpack.c.l.b16 %v1628
        %v1721 = vunpack.c.h.b16 %v1628
        %v1722 = vunpack.c.l.b16 %v1629
        %v1723 = vunpack.c.h.b16 %v1629
        %v1724 = vunpack.c.l.b16 %v1630
        %v1725 = vunpack.c.h.b16 %v1630
        %v1726 = vunpack.c.l.b16 %v1631
        %v1727 = vunpack.c.h.b16 %v1631
        %v1728 = vunpack.c.l.b16 %v1632
        %v1729 = vunpack.c.h.b16 %v1632
        %v1730 = vunpack.c.l.b16 %v1633
        %v1731 = vunpack.c.h.b16 %v1633
        %v1732 = vunpack.c.l.b16 %v1634
        %v1733 = vunpack.c.h.b16 %v1634
        %v1734 = vunpack.c.l.b16 %v1635
        %v1735 = vunpack.c.h.b16 %v1635
        %v1736 = vunpack.c.l.b16 %v1636
        %v1737 = vunpack.c.h.b16 %v1636
        %v1738 = vunpack.c.l.b16 %v1637
        %v1739 = vunpack.c.h.b16 %v1637
        %v1740 = vunpack.c.l.b16 %v1638
        %v1741 = vunpack.c.h.b16 %v1638
        %v1742 = vunpack.c.l.b16 %v1639
        %v1743 = vunpack.c.h.b16 %v1639
        %v1744 = vunpack.c.l.b16 %v1640
        %v1745 = vunpack.c.h.b16 %v1640
        %v1746 = vunpack.c.l.b16 %v1641
        %v1747 = vunpack.c.h.b16 %v1641
        %v1748 = vunpack.c.l.b16 %v1642
        %v1749 = vunpack.c.h.b16 %v1642
        %v1750 = vunpack.c.l.b16 %v1643
        %v1751 = vunpack.c.h.b16 %v1643
        %v1752 = vunpack.c.l.b16 %v1644
        %v1753 = vunpack.c.h.b16 %v1644
        %v1754 = vunpack.c.l.b16 %v1645
        %v1755 = vunpack.c.h.b16 %v1645
        %v1756 = vunpack.c.l.b16 %v1646
        %v1757 = vunpack.c.h.b16 %v1646
        %v1758 = vunpack.c.l.b16 %v1647
        %v1759 = vunpack.c.h.b16 %v1647
        %v1760 = vunpack.c.l.b16 %v1648
        %v1761 = vunpack.c.h.b16 %v1648
        %v1762 = vunpack.c.l.b16 %v1649
        %v1763 = vunpack.c.h.b16 %v1649
        %v1764 = vunpack.c.l.b16 %v1650
        %v1765 = vunpack.c.h.b16 %v1650
        %v1766 = vunpack.c.l.b16 %v1651
        %v1767 = vunpack.c.h.b16 %v1651
        %v1768 = vunpack.c.l.b16 %v1652
        %v1769 = vunpack.c.h.b16 %v1652
        %v1770 = vunpack.c.l.b16 %v1653
        %v1771 = vunpack.c.h.b16 %v1653
        %v1772 = vpack.c.b16 %v1712, %v1708
        %v1773 = vpack.c.b16 %v1713, %v1709
        %v1774 = vpack.c.b16 %v1714, %v1710
        %v1775 = vpack.c.b16 %v1715, %v1711
        %v1776 = vpack.c.b16 %v1720, %v1716
        %v1777 = vpack.c.b16 %v1721, %v1717
        %v1778 = vpack.c.b16 %v1722, %v1718
        %v1779 = vpack.c.b16 %v1723, %v1719
        %v1780 = vpack.c.b16 %v1728, %v1724
        %v1781 = vpack.c.b16 %v1729, %v1725
        %v1782 = vpack.c.b16 %v1730, %v1726
        %v1783 = vpack.c.b16 %v1731, %v1727
        %v1784 = vpack.c.b16 %v1736, %v1732
        %v1785 = vpack.c.b16 %v1737, %v1733
        %v1786 = vpack.c.b16 %v1738, %v1734
        %v1787 = vpack.c.b16 %v1739, %v1735
        %v1788 = vpack.c.b16 %v1744, %v1740
        %v1789 = vpack.c.b16 %v1745, %v1741
        %v1790 = vpack.c.b16 %v1746, %v1742
        %v1791 = vpack.c.b16 %v1747, %v1743
        %v1792 = vpack.c.b16 %v1752, %v1748
        %v1793 = vpack.c.b16 %v1753, %v1749
        %v1794 = vpack.c.b16 %v1754, %v1750
        %v1795 = vpack.c.b16 %v1755, %v1751
        %v1796 = vpack.c.b16 %v1760, %v1756
        %v1797 = vpack.c.b16 %v1761, %v1757
        %v1798 = vpack.c.b16 %v1762, %v1758
        %v1799 = vpack.c.b16 %v1763, %v1759
        %v1800 = vpack.c.b16 %v1768, %v1764
        %v1801 = vpack.c.b16 %v1769, %v1765
        %v1802 = vpack.c.b16 %v1770, %v1766
        %v1803 = vpack.c.b16 %v1771, %v1767
        %1836 = vmatprep.subr.bf16.mxu0 %v1773
        %1837 = vmatpush1.bf16.msra.mxu0 %v1772
        %1838 = vmatprep.subr.bf16.mxu0 %v1777
        %1839 = vmatpush1.bf16.msra.mxu0 %v1776
        %1840 = vmatprep.subr.bf16.mxu0 %v1781
        %1841 = vmatpush1.bf16.msra.mxu0 %v1780
        %1842 = vmatprep.subr.bf16.mxu0 %v1785
        %1843 = vmatpush1.bf16.msra.mxu0 %v1784
        %1844 = vmatprep.subr.bf16.mxu0 %v1789
        %1845 = vmatpush1.bf16.msra.mxu0 %v1788
        %1846 = vmatprep.subr.bf16.mxu0 %v1793
        %1847 = vmatpush1.bf16.msra.mxu0 %v1792
        %1848 = vmatprep.subr.bf16.mxu0 %v1797
        %1849 = vmatpush1.bf16.msra.mxu0 %v1796
        %1850 = vmatprep.subr.bf16.mxu0 %v1801
        %1851 = vmatpush1.bf16.msra.mxu0 %v1800
        %1852 = vmatprep.subr.bf16.mxu0 0
        %1853 = vmatpush1.bf16.msra.mxu0 0
        %1854 = vmatprep.subr.bf16.mxu0 0
        %1855 = vmatpush1.bf16.msra.mxu0 0
        %1856 = vmatprep.subr.bf16.mxu0 0
        %1857 = vmatpush1.bf16.msra.mxu0 0
        %1858 = vmatprep.subr.bf16.mxu0 0
        %1859 = vmatpush1.bf16.msra.mxu0 0
        %1860 = vmatprep.subr.bf16.mxu0 0
        %1861 = vmatpush1.bf16.msra.mxu0 0
        %1862 = vmatprep.subr.bf16.mxu0 0
        %1863 = vmatpush1.bf16.msra.mxu0 0
        %1864 = vmatprep.subr.bf16.mxu0 0
        %1865 = vmatpush1.bf16.msra.mxu0 0
        %1866 = vmatprep.subr.bf16.mxu0 0
        %1867 = vmatpush1.bf16.msra.mxu0 0
        %1868 = vmatprep.mubr.bf16.mxu0 0
        %1869 = vmatmul.mubr.bf16.gmra.mrb[0].mxu0 %v1621
        %v1870 = vpop.f32.mrb[0].mxu0
        %v1871 = vadd.f32 %v1659, %v1870
        %v1872 = vpop.f32.mrb[0].mxu0
        %v1873 = vadd.f32 %v1663, %v1872
        %v1874 = vpop.f32.mrb[0].mxu0
        %v1875 = vadd.f32 %v1659, %v1874
        %v1876 = vpop.f32.mrb[0].mxu0
        %v1877 = vadd.f32 %v1663, %v1876
        %1878 = vdwg.mxu0
        %1879 = vmatprep.subr.bf16.mxu0 %v1775
        %1880 = vmatpush1.bf16.msra.mxu0 %v1774
        %1881 = vmatprep.subr.bf16.mxu0 %v1779
        %1882 = vmatpush1.bf16.msra.mxu0 %v1778
        %1883 = vmatprep.subr.bf16.mxu0 %v1783
        %1884 = vmatpush1.bf16.msra.mxu0 %v1782
        %1885 = vmatprep.subr.bf16.mxu0 %v1787
        %1886 = vmatpush1.bf16.msra.mxu0 %v1786
        %1887 = vmatprep.subr.bf16.mxu0 %v1791
        %1888 = vmatpush1.bf16.msra.mxu0 %v1790
        %1889 = vmatprep.subr.bf16.mxu0 %v1795
        %1890 = vmatpush1.bf16.msra.mxu0 %v1794
        %1891 = vmatprep.subr.bf16.mxu0 %v1799
        %1892 = vmatpush1.bf16.msra.mxu0 %v1798
        %1893 = vmatprep.subr.bf16.mxu0 %v1803
        %1894 = vmatpush1.bf16.msra.mxu0 %v1802
        %1895 = vmatprep.subr.bf16.mxu0 0
        %1896 = vmatpush1.bf16.msra.mxu0 0
        %1897 = vmatprep.subr.bf16.mxu0 0
        %1898 = vmatpush1.bf16.msra.mxu0 0
        %1899 = vmatprep.subr.bf16.mxu0 0
        %1900 = vmatpush1.bf16.msra.mxu0 0
        %1901 = vmatprep.subr.bf16.mxu0 0
        %1902 = vmatpush1.bf16.msra.mxu0 0
        %1903 = vmatprep.subr.bf16.mxu0 0
        %1904 = vmatpush1.bf16.msra.mxu0 0
        %1905 = vmatprep.subr.bf16.mxu0 0
        %1906 = vmatpush1.bf16.msra.mxu0 0
        %1907 = vmatprep.subr.bf16.mxu0 0
        %1908 = vmatpush1.bf16.msra.mxu0 0
        %1909 = vmatprep.subr.bf16.mxu0 0
        %1910 = vmatpush1.bf16.msra.mxu0 0
        %1911 = vmatprep.mubr.bf16.mxu0 0
        %1912 = vmatmul.mubr.bf16.gmra.mrb[0].mxu0 %v1621
        %v1913 = vpop.f32.mrb[0].mxu0
        %v1914 = vadd.f32 %v1667, %v1913
        %v1915 = vpop.f32.mrb[0].mxu0
        %v1916 = vadd.f32 %v1671, %v1915
        %v1917 = vpop.f32.mrb[0].mxu0
        %v1918 = vadd.f32 %v1667, %v1917
        %v1919 = vpop.f32.mrb[0].mxu0
        %v1920 = vadd.f32 %v1671, %v1919
        %1921 = vdwg.mxu0
        %v1922 = vmul.f32 %v1871, 0.5
        %v1923 = vmul.f32 %v1873, 0.5
        %v1924 = vmul.f32 %v1914, 0.5
        %v1925 = vmul.f32 %v1916, 0.5
        %v1926 = vmul.f32 %v1875, 0.5
        %v1927 = vmul.f32 %v1877, 0.5
        %v1928 = vmul.f32 %v1918, 0.5
        %v1929 = vmul.f32 %v1920, 0.5
        %v1930 = vmul.f32 %v1871, 0.044715
        %v1931 = vmul.f32 %v1873, 0.044715
        %v1932 = vmul.f32 %v1914, 0.044715
        %v1933 = vmul.f32 %v1916, 0.044715
        %v1934 = vmul.f32 %v1875, 0.044715
        %v1935 = vmul.f32 %v1877, 0.044715
        %v1936 = vmul.f32 %v1918, 0.044715
        %v1937 = vmul.f32 %v1920, 0.044715
        %v1938 = vmul.f32 %v1930, %v1871
        %v1939 = vmul.f32 %v1931, %v1873
        %v1940 = vmul.f32 %v1932, %v1914
        %v1941 = vmul.f32 %v1933, %v1916
        %v1942 = vmul.f32 %v1934, %v1875
        %v1943 = vmul.f32 %v1935, %v1877
        %v1944 = vmul.f32 %v1936, %v1918
        %v1945 = vmul.f32 %v1937, %v1920
        %v1946 = vmul.f32 %v1938, %v1871
        %v1947 = vmul.f32 %v1939, %v1873
        %v1948 = vmul.f32 %v1940, %v1914
        %v1949 = vmul.f32 %v1941, %v1916
        %v1950 = vmul.f32 %v1942, %v1875
        %v1951 = vmul.f32 %v1943, %v1877
        %v1952 = vmul.f32 %v1944, %v1918
        %v1953 = vmul.f32 %v1945, %v1920
        %v1954 = vadd.f32 %v1871, %v1946
        %v1955 = vadd.f32 %v1873, %v1947
        %v1956 = vadd.f32 %v1914, %v1948
        %v1957 = vadd.f32 %v1916, %v1949
        %v1958 = vadd.f32 %v1875, %v1950
        %v1959 = vadd.f32 %v1877, %v1951
        %v1960 = vadd.f32 %v1918, %v1952
        %v1961 = vadd.f32 %v1920, %v1953
        %v1962 = vmul.f32 %v1954, 0.7978846
        %v1963 = vmul.f32 %v1955, 0.7978846
        %v1964 = vmul.f32 %v1956, 0.7978846
        %v1965 = vmul.f32 %v1957, 0.7978846
        %v1966 = vmul.f32 %v1958, 0.7978846
        %v1967 = vmul.f32 %v1959, 0.7978846
        %v1968 = vmul.f32 %v1960, 0.7978846
        %v1969 = vmul.f32 %v1961, 0.7978846
        %v1970 = vtanh.pop %v1962
        %v1971 = vtanh.pop %v1963
        %v1972 = vtanh.pop %v1964
        %v1973 = vtanh.pop %v1965
        %v1974 = vtanh.pop %v1966
        %v1975 = vtanh.pop %v1967
        %v1976 = vtanh.pop %v1968
        %v1977 = vtanh.pop %v1969
        %v1978 = vadd.f32 %v1970, 1.0
        %v1979 = vadd.f32 %v1971, 1.0
        %v1980 = vadd.f32 %v1972, 1.0
        %v1981 = vadd.f32 %v1973, 1.0
        %v1982 = vadd.f32 %v1974, 1.0
        %v1983 = vadd.f32 %v1975, 1.0
        %v1984 = vadd.f32 %v1976, 1.0
        %v1985 = vadd.f32 %v1977, 1.0
        %v1986 = vmul.f32 %v1922, %v1978
        %v1987 = vmul.f32 %v1923, %v1979
        %v1988 = vmul.f32 %v1924, %v1980
        %v1989 = vmul.f32 %v1925, %v1981
        %v1990 = vmul.f32 %v1926, %v1982
        %v1991 = vmul.f32 %v1927, %v1983
        %v1992 = vmul.f32 %v1928, %v1984
        %v1993 = vmul.f32 %v1929, %v1985
        %v1994 = vpack.c.bf16 %v1990, %v1986
        %v1995 = vpack.c.bf16 %v1991, %v1987
        %v1996 = vpack.c.bf16 %v1992, %v1988
        %v1997 = vpack.c.bf16 %v1993, %v1989
        %v1998 = vld [vmem:[%s841] sm:$0xf]
        %v1999 = vld [vmem:[%s841 + $0x4] sm:$0xf]
        %v2000 = vld [vmem:[%s841 + $0x8] sm:$0xf]
        %v2001 = vld [vmem:[%s841 + $0xc] sm:$0xf]
        %v2002 = vld [vmem:[%s841 + $0x10] sm:$0xf]
        %v2003 = vld [vmem:[%s841 + $0x14] sm:$0xf]
        %v2004 = vld [vmem:[%s841 + $0x18] sm:$0xf]
        %v2005 = vld [vmem:[%s841 + $0x1c] sm:$0xf]
        %v2006 = vld [vmem:[%s841 + $0x20] sm:$0xf]
        %v2007 = vld [vmem:[%s841 + $0x24] sm:$0xf]
        %v2008 = vld [vmem:[%s841 + $0x28] sm:$0xf]
        %v2009 = vld [vmem:[%s841 + $0x2c] sm:$0xf]
        %v2010 = vld [vmem:[%s841 + $0x30] sm:$0xf]
        %v2011 = vld [vmem:[%s841 + $0x34] sm:$0xf]
        %v2012 = vld [vmem:[%s841 + $0x38] sm:$0xf]
        %v2013 = vld [vmem:[%s841 + $0x3c] sm:$0xf]
        %v2014 = vld [vmem:[%s841 + $0x40] sm:$0xf]
        %v2015 = vld [vmem:[%s841 + $0x44] sm:$0xf]
        %v2016 = vld [vmem:[%s841 + $0x48] sm:$0xf]
        %v2017 = vld [vmem:[%s841 + $0x4c] sm:$0xf]
        %v2018 = vld [vmem:[%s841 + $0x50] sm:$0xf]
        %v2019 = vld [vmem:[%s841 + $0x54] sm:$0xf]
        %v2020 = vld [vmem:[%s841 + $0x58] sm:$0xf]
        %v2021 = vld [vmem:[%s841 + $0x5c] sm:$0xf]
        %v2022 = vld [vmem:[%s841 + $0x60] sm:$0xf]
        %v2023 = vld [vmem:[%s841 + $0x64] sm:$0xf]
        %v2024 = vld [vmem:[%s841 + $0x68] sm:$0xf]
        %v2025 = vld [vmem:[%s841 + $0x6c] sm:$0xf]
        %v2026 = vld [vmem:[%s841 + $0x70] sm:$0xf]
        %v2027 = vld [vmem:[%s841 + $0x74] sm:$0xf]
        %v2028 = vld [vmem:[%s841 + $0x78] sm:$0xf]
        %v2029 = vld [vmem:[%s841 + $0x7c] sm:$0xf]
        %v2030 = vld [vmem:[%s841 + $0x80] sm:$0xf]
        %v2031 = vld [vmem:[%s841 + $0x84] sm:$0xf]
        %v2032 = vld [vmem:[%s841 + $0x88] sm:$0xf]
        %v2033 = vld [vmem:[%s841 + $0x8c] sm:$0xf]
        %v2034 = vld [vmem:[%s841 + $0x90] sm:$0xf]
        %v2035 = vld [vmem:[%s841 + $0x94] sm:$0xf]
        %v2036 = vld [vmem:[%s841 + $0x98] sm:$0xf]
        %v2037 = vld [vmem:[%s841 + $0x9c] sm:$0xf]
        %v2038 = vld [vmem:[%s841 + $0xa0] sm:$0xf]
        %v2039 = vld [vmem:[%s841 + $0xa4] sm:$0xf]
        %v2040 = vld [vmem:[%s841 + $0xa8] sm:$0xf]
        %v2041 = vld [vmem:[%s841 + $0xac] sm:$0xf]
        %v2042 = vld [vmem:[%s841 + $0xb0] sm:$0xf]
        %v2043 = vld [vmem:[%s841 + $0xb4] sm:$0xf]
        %v2044 = vld [vmem:[%s841 + $0xb8] sm:$0xf]
        %v2045 = vld [vmem:[%s841 + $0xbc] sm:$0xf]
        %v2046 = vld [vmem:[%s841 + $0xc0] sm:$0xf]
        %v2047 = vld [vmem:[%s841 + $0xc4] sm:$0xf]
        %v2048 = vld [vmem:[%s841 + $0xc8] sm:$0xf]
        %v2049 = vld [vmem:[%s841 + $0xcc] sm:$0xf]
        %v2050 = vld [vmem:[%s841 + $0xd0] sm:$0xf]
        %v2051 = vld [vmem:[%s841 + $0xd4] sm:$0xf]
        %v2052 = vld [vmem:[%s841 + $0xd8] sm:$0xf]
        %v2053 = vld [vmem:[%s841 + $0xdc] sm:$0xf]
        %v2054 = vld [vmem:[%s841 + $0xe0] sm:$0xf]
        %v2055 = vld [vmem:[%s841 + $0xe4] sm:$0xf]
        %v2056 = vld [vmem:[%s841 + $0xe8] sm:$0xf]
        %v2057 = vld [vmem:[%s841 + $0xec] sm:$0xf]
        %v2058 = vld [vmem:[%s841 + $0xf0] sm:$0xf]
        %v2059 = vld [vmem:[%s841 + $0xf4] sm:$0xf]
        %v2060 = vld [vmem:[%s841 + $0xf8] sm:$0xf]
        %v2061 = vld [vmem:[%s841 + $0xfc] sm:$0xf]
        %v2062 = vld [vmem:[%s844] sm:$0x1]
        %v2064 = vlaneseq
        %v2065 = vshrl.u32 %v2064, 7
        %v2066 = vsub.s32 0, %v2065
        %v2067 = vrot.slane %v2062, %v2066
        %v2133 = vunpack.c.l.b16 %v1998
        %v2134 = vunpack.c.l.b16 %v1999
        %v2135 = vunpack.c.l.b16 %v2000
        %v2136 = vunpack.c.l.b16 %v2001
        %v2137 = vunpack.c.l.b16 %v2002
        %v2138 = vunpack.c.l.b16 %v2003
        %v2139 = vunpack.c.l.b16 %v2004
        %v2140 = vunpack.c.l.b16 %v2005
        %v2141 = vunpack.c.l.b16 %v2006
        %v2142 = vunpack.c.l.b16 %v2007
        %v2143 = vunpack.c.l.b16 %v2008
        %v2144 = vunpack.c.l.b16 %v2009
        %v2145 = vunpack.c.l.b16 %v2010
        %v2146 = vunpack.c.l.b16 %v2011
        %v2147 = vunpack.c.l.b16 %v2012
        %v2148 = vunpack.c.l.b16 %v2013
        %v2149 = vunpack.c.l.b16 %v2014
        %v2150 = vunpack.c.l.b16 %v2015
        %v2151 = vunpack.c.l.b16 %v2016
        %v2152 = vunpack.c.l.b16 %v2017
        %v2153 = vunpack.c.l.b16 %v2018
        %v2154 = vunpack.c.l.b16 %v2019
        %v2155 = vunpack.c.l.b16 %v2020
        %v2156 = vunpack.c.l.b16 %v2021
        %v2157 = vunpack.c.l.b16 %v2022
        %v2158 = vunpack.c.l.b16 %v2023
        %v2159 = vunpack.c.l.b16 %v2024
        %v2160 = vunpack.c.l.b16 %v2025
        %v2161 = vunpack.c.l.b16 %v2026
        %v2162 = vunpack.c.l.b16 %v2027
        %v2163 = vunpack.c.l.b16 %v2028
        %v2164 = vunpack.c.l.b16 %v2029
        %v2165 = vunpack.c.l.b16 %v2030
        %v2166 = vunpack.c.l.b16 %v2031
        %v2167 = vunpack.c.l.b16 %v2032
        %v2168 = vunpack.c.l.b16 %v2033
        %v2169 = vunpack.c.l.b16 %v2034
        %v2170 = vunpack.c.l.b16 %v2035
        %v2171 = vunpack.c.l.b16 %v2036
        %v2172 = vunpack.c.l.b16 %v2037
        %v2173 = vunpack.c.l.b16 %v2038
        %v2174 = vunpack.c.l.b16 %v2039
        %v2175 = vunpack.c.l.b16 %v2040
        %v2176 = vunpack.c.l.b16 %v2041
        %v2177 = vunpack.c.l.b16 %v2042
        %v2178 = vunpack.c.l.b16 %v2043
        %v2179 = vunpack.c.l.b16 %v2044
        %v2180 = vunpack.c.l.b16 %v2045
        %v2181 = vunpack.c.l.b16 %v2046
        %v2182 = vunpack.c.l.b16 %v2047
        %v2183 = vunpack.c.l.b16 %v2048
        %v2184 = vunpack.c.l.b16 %v2049
        %v2185 = vunpack.c.l.b16 %v2050
        %v2186 = vunpack.c.l.b16 %v2051
        %v2187 = vunpack.c.l.b16 %v2052
        %v2188 = vunpack.c.l.b16 %v2053
        %v2189 = vunpack.c.l.b16 %v2054
        %v2190 = vunpack.c.l.b16 %v2055
        %v2191 = vunpack.c.l.b16 %v2056
        %v2192 = vunpack.c.l.b16 %v2057
        %v2193 = vunpack.c.l.b16 %v2058
        %v2194 = vunpack.c.l.b16 %v2059
        %v2195 = vunpack.c.l.b16 %v2060
        %v2196 = vunpack.c.l.b16 %v2061
        %v2197 = vpack.c.b16 %v2134, %v2133
        %v2198 = vpack.c.b16 %v2136, %v2135
        %v2199 = vpack.c.b16 %v2138, %v2137
        %v2200 = vpack.c.b16 %v2140, %v2139
        %v2201 = vpack.c.b16 %v2142, %v2141
        %v2202 = vpack.c.b16 %v2144, %v2143
        %v2203 = vpack.c.b16 %v2146, %v2145
        %v2204 = vpack.c.b16 %v2148, %v2147
        %v2205 = vpack.c.b16 %v2150, %v2149
        %v2206 = vpack.c.b16 %v2152, %v2151
        %v2207 = vpack.c.b16 %v2154, %v2153
        %v2208 = vpack.c.b16 %v2156, %v2155
        %v2209 = vpack.c.b16 %v2158, %v2157
        %v2210 = vpack.c.b16 %v2160, %v2159
        %v2211 = vpack.c.b16 %v2162, %v2161
        %v2212 = vpack.c.b16 %v2164, %v2163
        %v2213 = vpack.c.b16 %v2166, %v2165
        %v2214 = vpack.c.b16 %v2168, %v2167
        %v2215 = vpack.c.b16 %v2170, %v2169
        %v2216 = vpack.c.b16 %v2172, %v2171
        %v2217 = vpack.c.b16 %v2174, %v2173
        %v2218 = vpack.c.b16 %v2176, %v2175
        %v2219 = vpack.c.b16 %v2178, %v2177
        %v2220 = vpack.c.b16 %v2180, %v2179
        %v2221 = vpack.c.b16 %v2182, %v2181
        %v2222 = vpack.c.b16 %v2184, %v2183
        %v2223 = vpack.c.b16 %v2186, %v2185
        %v2224 = vpack.c.b16 %v2188, %v2187
        %v2225 = vpack.c.b16 %v2190, %v2189
        %v2226 = vpack.c.b16 %v2192, %v2191
        %v2227 = vpack.c.b16 %v2194, %v2193
        %v2228 = vpack.c.b16 %v2196, %v2195
        %2261 = vmatprep.subr.bf16.mxu0 0
        %2262 = vmatpush1.bf16.msra.mxu0 %v2197
        %2263 = vmatprep.subr.bf16.mxu0 0
        %2264 = vmatpush1.bf16.msra.mxu0 %v2198
        %2265 = vmatprep.subr.bf16.mxu0 0
        %2266 = vmatpush1.bf16.msra.mxu0 %v2199
        %2267 = vmatprep.subr.bf16.mxu0 0
        %2268 = vmatpush1.bf16.msra.mxu0 %v2200
        %2269 = vmatprep.subr.bf16.mxu0 0
        %2270 = vmatpush1.bf16.msra.mxu0 %v2201
        %2271 = vmatprep.subr.bf16.mxu0 0
        %2272 = vmatpush1.bf16.msra.mxu0 %v2202
        %2273 = vmatprep.subr.bf16.mxu0 0
        %2274 = vmatpush1.bf16.msra.mxu0 %v2203
        %2275 = vmatprep.subr.bf16.mxu0 0
        %2276 = vmatpush1.bf16.msra.mxu0 %v2204
        %2277 = vmatprep.subr.bf16.mxu0 0
        %2278 = vmatpush1.bf16.msra.mxu0 %v2205
        %2279 = vmatprep.subr.bf16.mxu0 0
        %2280 = vmatpush1.bf16.msra.mxu0 %v2206
        %2281 = vmatprep.subr.bf16.mxu0 0
        %2282 = vmatpush1.bf16.msra.mxu0 %v2207
        %2283 = vmatprep.subr.bf16.mxu0 0
        %2284 = vmatpush1.bf16.msra.mxu0 %v2208
        %2285 = vmatprep.subr.bf16.mxu0 0
        %2286 = vmatpush1.bf16.msra.mxu0 %v2209
        %2287 = vmatprep.subr.bf16.mxu0 0
        %2288 = vmatpush1.bf16.msra.mxu0 %v2210
        %2289 = vmatprep.subr.bf16.mxu0 0
        %2290 = vmatpush1.bf16.msra.mxu0 %v2211
        %2291 = vmatprep.subr.bf16.mxu0 0
        %2292 = vmatpush1.bf16.msra.mxu0 %v2212
        %2293 = vmatprep.mubr.bf16.mxu0 %v1995
        %2294 = vmatmul.mubr.bf16.gmra.mrb[0].mxu0 %v1994
        %v2295 = vpop.f32.mrb[0].mxu0
        %v2296 = vadd.f32 %v2067, %v2295
        %v2297 = vpop.f32.mrb[0].mxu0
        %v2298 = vpop.f32.mrb[0].mxu0
        %v2299 = vadd.f32 %v2067, %v2298
        %v2300 = vpop.f32.mrb[0].mxu0
        %2301 = vdwg.mxu0
        %2302 = vmatprep.subr.bf16.mxu0 0
        %2303 = vmatpush1.bf16.msra.mxu0 %v2213
        %2304 = vmatprep.subr.bf16.mxu0 0
        %2305 = vmatpush1.bf16.msra.mxu0 %v2214
        %2306 = vmatprep.subr.bf16.mxu0 0
        %2307 = vmatpush1.bf16.msra.mxu0 %v2215
        %2308 = vmatprep.subr.bf16.mxu0 0
        %2309 = vmatpush1.bf16.msra.mxu0 %v2216
        %2310 = vmatprep.subr.bf16.mxu0 0
        %2311 = vmatpush1.bf16.msra.mxu0 %v2217
        %2312 = vmatprep.subr.bf16.mxu0 0
        %2313 = vmatpush1.bf16.msra.mxu0 %v2218
        %2314 = vmatprep.subr.bf16.mxu0 0
        %2315 = vmatpush1.bf16.msra.mxu0 %v2219
        %2316 = vmatprep.subr.bf16.mxu0 0
        %2317 = vmatpush1.bf16.msra.mxu0 %v2220
        %2318 = vmatprep.subr.bf16.mxu0 0
        %2319 = vmatpush1.bf16.msra.mxu0 %v2221
        %2320 = vmatprep.subr.bf16.mxu0 0
        %2321 = vmatpush1.bf16.msra.mxu0 %v2222
        %2322 = vmatprep.subr.bf16.mxu0 0
        %2323 = vmatpush1.bf16.msra.mxu0 %v2223
        %2324 = vmatprep.subr.bf16.mxu0 0
        %2325 = vmatpush1.bf16.msra.mxu0 %v2224
        %2326 = vmatprep.subr.bf16.mxu0 0
        %2327 = vmatpush1.bf16.msra.mxu0 %v2225
        %2328 = vmatprep.subr.bf16.mxu0 0
        %2329 = vmatpush1.bf16.msra.mxu0 %v2226
        %2330 = vmatprep.subr.bf16.mxu0 0
        %2331 = vmatpush1.bf16.msra.mxu0 %v2227
        %2332 = vmatprep.subr.bf16.mxu0 0
        %2333 = vmatpush1.bf16.msra.mxu0 %v2228
        %2334 = vmatprep.mubr.bf16.mxu0 %v1997
        %2335 = vmatmul.mubr.bf16.gmra.mrb[0].mxu0 %v1996
        %v2336 = vpop.f32.mrb[0].mxu0
        %v2337 = vadd.f32 %v2296, %v2336
        %v2338 = vpop.f32.mrb[0].mxu0
        %v2339 = vpop.f32.mrb[0].mxu0
        %v2340 = vadd.f32 %v2299, %v2339
        %v2341 = vpop.f32.mrb[0].mxu0
        %2342 = vdwg.mxu0
        %v2343 = vadd.f32 %v2337, %v1619
        %v2344 = vadd.f32 %v2340, %v1620
        %v2345 = vld [vmem:[%s847] sm:$0x1]
        %v2346 = vld [vmem:[%s850] sm:$0x1]
        %2347 = vadd.xlane.f32.xlu0 %v2343
        %v2348 = vpop.xlane.xlu0 %2347
        %2349 = vadd.xlane.f32.xlu0 %v2344
        %v2350 = vpop.xlane.xlu0 %2349
        %v2351 = vmul.f32 %v2348, %v1586
        %v2352 = vmul.f32 %v2350, %v1586
        %v2353 = vsub.f32 %v2343, %v2351
        %v2354 = vsub.f32 %v2344, %v2352
        %v2355 = vmul.f32 %v2353, %v2353
        %v2356 = vmul.f32 %v2354, %v2354
        %2357 = vadd.xlane.f32.xlu0 %v2355
        %v2358 = vpop.xlane.xlu0 %2357
        %2359 = vadd.xlane.f32.xlu0 %v2356
        %v2360 = vpop.xlane.xlu0 %2359
        %v2361 = vmul.f32 %v2358, %v1586
        %v2362 = vmul.f32 %v2360, %v1586
        %v2363 = vadd.f32 %v2361, 1e-12
        %v2364 = vadd.f32 %v2362, 1e-12
        %v2365 = vrsqrt.pop %v2363
        %v2366 = vrsqrt.pop %v2364
        %v2367 = vmul.f32 %v2353, %v2365
        %v2368 = vmul.f32 %v2354, %v2366
        %v2370 = vlaneseq
        %v2371 = vshrl.u32 %v2370, 7
        %v2372 = vsub.s32 0, %v2371
        %v2373 = vrot.slane %v2345, %v2372
        %v2375 = vmul.f32 %v2367, %v2373
        %v2376 = vmul.f32 %v2368, %v2373
        %v2378 = vlaneseq
        %v2379 = vshrl.u32 %v2378, 7
        %v2380 = vsub.s32 0, %v2379
        %v2381 = vrot.slane %v2346, %v2380
        %v2383 = vadd.f32 %v2375, %v2381
        %v2384 = vadd.f32 %v2376, %v2381
        %2385 = vst [vmem:[#allocation2] sm:$0xff] %v2383
        %2386 = vst [vmem:[#allocation2 + $0x8] sm:$0xff] %v2384
        %p2387 = scmp.eq.s32.totalorder %s39, 1
        // Predicated region
        $region105: #{bert_base_forward.1} parent=99 // pred_check
          %p2388 = pneg %p2387
        $region106: #{bert_base_forward.1} parent=99 // pred_check_branch
          %2390 = sbr.rel (%p2388) target = $region108
        $region107: #{bert_base_forward.1} parent=99 // pred_region
          %v2391 = vpack.c.bf16 %v2383, %v2383
          %v2392 = vld [vmem:[%s16] sm:$0xff]
          %v2393 = vld [vmem:[%s16 + $0x8] sm:$0xff]
          %v2394 = vld [vmem:[%s16 + $0x10] sm:$0xff]
          %v2395 = vld [vmem:[%s16 + $0x18] sm:$0xff]
          %v2396 = vld [vmem:[%s16 + $0x20] sm:$0xff]
          %v2397 = vld [vmem:[%s16 + $0x28] sm:$0xff]
          %v2398 = vld [vmem:[%s16 + $0x30] sm:$0xff]
          %v2399 = vld [vmem:[%s16 + $0x38] sm:$0xff]
          %v2400 = vld [vmem:[%s16 + $0x40] sm:$0xff]
          %v2401 = vld [vmem:[%s16 + $0x48] sm:$0xff]
          %v2402 = vld [vmem:[%s16 + $0x50] sm:$0xff]
          %v2403 = vld [vmem:[%s16 + $0x58] sm:$0xff]
          %v2404 = vld [vmem:[%s16 + $0x60] sm:$0xff]
          %v2405 = vld [vmem:[%s16 + $0x68] sm:$0xff]
          %v2406 = vld [vmem:[%s16 + $0x70] sm:$0xff]
          %v2407 = vld [vmem:[%s16 + $0x78] sm:$0xff]
          %v2408 = vld [vmem:[%s17] sm:$0x3]
          %v2425 = vunpack.c.l.b16 %v2392
          %v2426 = vunpack.c.h.b16 %v2392
          %v2427 = vunpack.c.l.b16 %v2393
          %v2428 = vunpack.c.h.b16 %v2393
          %v2429 = vunpack.c.l.b16 %v2394
          %v2430 = vunpack.c.h.b16 %v2394
          %v2431 = vunpack.c.l.b16 %v2395
          %v2432 = vunpack.c.h.b16 %v2395
          %v2433 = vunpack.c.l.b16 %v2396
          %v2434 = vunpack.c.h.b16 %v2396
          %v2435 = vunpack.c.l.b16 %v2397
          %v2436 = vunpack.c.h.b16 %v2397
          %v2437 = vunpack.c.l.b16 %v2398
          %v2438 = vunpack.c.h.b16 %v2398
          %v2439 = vunpack.c.l.b16 %v2399
          %v2440 = vunpack.c.h.b16 %v2399
          %v2441 = vunpack.c.l.b16 %v2400
          %v2442 = vunpack.c.h.b16 %v2400
          %v2443 = vunpack.c.l.b16 %v2401
          %v2444 = vunpack.c.h.b16 %v2401
          %v2445 = vunpack.c.l.b16 %v2402
          %v2446 = vunpack.c.h.b16 %v2402
          %v2447 = vunpack.c.l.b16 %v2403
          %v2448 = vunpack.c.h.b16 %v2403
          %v2449 = vunpack.c.l.b16 %v2404
          %v2450 = vunpack.c.h.b16 %v2404
          %v2451 = vunpack.c.l.b16 %v2405
          %v2452 = vunpack.c.h.b16 %v2405
          %v2453 = vunpack.c.l.b16 %v2406
          %v2454 = vunpack.c.h.b16 %v2406
          %v2455 = vunpack.c.l.b16 %v2407
          %v2456 = vunpack.c.h.b16 %v2407
          %v2457 = vpack.c.b16 %v2427, %v2425
          %v2458 = vpack.c.b16 %v2428, %v2426
          %v2459 = vpack.c.b16 %v2431, %v2429
          %v2460 = vpack.c.b16 %v2432, %v2430
          %v2461 = vpack.c.b16 %v2435, %v2433
          %v2462 = vpack.c.b16 %v2436, %v2434
          %v2463 = vpack.c.b16 %v2439, %v2437
          %v2464 = vpack.c.b16 %v2440, %v2438
          %v2465 = vpack.c.b16 %v2443, %v2441
          %v2466 = vpack.c.b16 %v2444, %v2442
          %v2467 = vpack.c.b16 %v2447, %v2445
          %v2468 = vpack.c.b16 %v2448, %v2446
          %v2469 = vpack.c.b16 %v2451, %v2449
          %v2470 = vpack.c.b16 %v2452, %v2450
          %v2471 = vpack.c.b16 %v2455, %v2453
          %v2472 = vpack.c.b16 %v2456, %v2454
          %v2490 = vlaneseq
          %v2491 = vshrl.u32 %v2490, 7
          %v2492 = vsub.s32 0, %v2491
          %v2493 = vrot.slane %v2408, %v2492
          %v2494 = vlaneseq
          %v2495 = vshrl.u32 %v2494, 7
          %v2496 = vsub.s32 1, %v2495
          %v2497 = vrot.slane %v2408, %v2496
          %2500 = vmatprep.subr.bf16.mxu0 %v2458
          %2501 = vmatpush1.bf16.msra.mxu0 %v2457
          %2502 = vmatprep.subr.bf16.mxu0 %v2460
          %2503 = vmatpush1.bf16.msra.mxu0 %v2459
          %2504 = vmatprep.subr.bf16.mxu0 %v2462
          %2505 = vmatpush1.bf16.msra.mxu0 %v2461
          %2506 = vmatprep.subr.bf16.mxu0 %v2464
          %2507 = vmatpush1.bf16.msra.mxu0 %v2463
          %2508 = vmatprep.subr.bf16.mxu0 %v2466
          %2509 = vmatpush1.bf16.msra.mxu0 %v2465
          %2510 = vmatprep.subr.bf16.mxu0 %v2468
          %2511 = vmatpush1.bf16.msra.mxu0 %v2467
          %2512 = vmatprep.subr.bf16.mxu0 %v2470
          %2513 = vmatpush1.bf16.msra.mxu0 %v2469
          %2514 = vmatprep.subr.bf16.mxu0 %v2472
          %2515 = vmatpush1.bf16.msra.mxu0 %v2471
          %2516 = vmatprep.subr.bf16.mxu0 0
          %2517 = vmatpush1.bf16.msra.mxu0 0
          %2518 = vmatprep.subr.bf16.mxu0 0
          %2519 = vmatpush1.bf16.msra.mxu0 0
          %2520 = vmatprep.subr.bf16.mxu0 0
          %2521 = vmatpush1.bf16.msra.mxu0 0
          %2522 = vmatprep.subr.bf16.mxu0 0
          %2523 = vmatpush1.bf16.msra.mxu0 0
          %2524 = vmatprep.subr.bf16.mxu0 0
          %2525 = vmatpush1.bf16.msra.mxu0 0
          %2526 = vmatprep.subr.bf16.mxu0 0
          %2527 = vmatpush1.bf16.msra.mxu0 0
          %2528 = vmatprep.subr.bf16.mxu0 0
          %2529 = vmatpush1.bf16.msra.mxu0 0
          %2530 = vmatprep.subr.bf16.mxu0 0
          %2531 = vmatpush1.bf16.msra.mxu0 0
          %2532 = vmatprep.mubr.bf16.mxu0 0
          %2533 = vmatmul.mubr.bf16.gmra.mrb[0].mxu0 %v2391
          %v2534 = vpop.f32.mrb[0].mxu0
          %v2535 = vadd.f32 %v2493, %v2534
          %v2536 = vpop.f32.mrb[0].mxu0
          %v2537 = vadd.f32 %v2497, %v2536
          %v2538 = vpop.f32.mrb[0].mxu0
          %v2539 = vpop.f32.mrb[0].mxu0
          %2540 = vdwg.mxu0
          %v2541 = vmax.f32 %v2535, 0.0
          %v2542 = vmax.f32 %v2537, 0.0
          %v2543 = vpack.c.bf16 %v2541, %v2541
          %v2544 = vpack.c.bf16 %v2542, %v2542
          %v2545 = vld [vmem:[%s18] sm:$0xf]
          %v2546 = vld [vmem:[%s18 + $0x4] sm:$0xf]
          %v2547 = vld [vmem:[%s18 + $0x8] sm:$0xf]
          %v2548 = vld [vmem:[%s18 + $0xc] sm:$0xf]
          %v2549 = vld [vmem:[%s18 + $0x10] sm:$0xf]
          %v2550 = vld [vmem:[%s18 + $0x14] sm:$0xf]
          %v2551 = vld [vmem:[%s18 + $0x18] sm:$0xf]
          %v2552 = vld [vmem:[%s18 + $0x1c] sm:$0xf]
          %v2553 = vld [vmem:[%s18 + $0x20] sm:$0xf]
          %v2554 = vld [vmem:[%s18 + $0x24] sm:$0xf]
          %v2555 = vld [vmem:[%s18 + $0x28] sm:$0xf]
          %v2556 = vld [vmem:[%s18 + $0x2c] sm:$0xf]
          %v2557 = vld [vmem:[%s18 + $0x30] sm:$0xf]
          %v2558 = vld [vmem:[%s18 + $0x34] sm:$0xf]
          %v2559 = vld [vmem:[%s18 + $0x38] sm:$0xf]
          %v2560 = vld [vmem:[%s18 + $0x3c] sm:$0xf]
          %v2561 = vld [vmem:[%s18 + $0x40] sm:$0xf]
          %v2562 = vld [vmem:[%s18 + $0x44] sm:$0xf]
          %v2563 = vld [vmem:[%s18 + $0x48] sm:$0xf]
          %v2564 = vld [vmem:[%s18 + $0x4c] sm:$0xf]
          %v2565 = vld [vmem:[%s18 + $0x50] sm:$0xf]
          %v2566 = vld [vmem:[%s18 + $0x54] sm:$0xf]
          %v2567 = vld [vmem:[%s18 + $0x58] sm:$0xf]
          %v2568 = vld [vmem:[%s18 + $0x5c] sm:$0xf]
          %v2569 = vld [vmem:[%s18 + $0x60] sm:$0xf]
          %v2570 = vld [vmem:[%s18 + $0x64] sm:$0xf]
          %v2571 = vld [vmem:[%s18 + $0x68] sm:$0xf]
          %v2572 = vld [vmem:[%s18 + $0x6c] sm:$0xf]
          %v2573 = vld [vmem:[%s18 + $0x70] sm:$0xf]
          %v2574 = vld [vmem:[%s18 + $0x74] sm:$0xf]
          %v2575 = vld [vmem:[%s18 + $0x78] sm:$0xf]
          %v2576 = vld [vmem:[%s18 + $0x7c] sm:$0xf]
          %v2577 = vld [vmem:[%s19] sm:$0x1]
          %v2610 = vunpack.c.l.b16 %v2545
          %v2611 = vunpack.c.l.b16 %v2546
          %v2612 = vunpack.c.l.b16 %v2547
          %v2613 = vunpack.c.l.b16 %v2548
          %v2614 = vunpack.c.l.b16 %v2549
          %v2615 = vunpack.c.l.b16 %v2550
          %v2616 = vunpack.c.l.b16 %v2551
          %v2617 = vunpack.c.l.b16 %v2552
          %v2618 = vunpack.c.l.b16 %v2553
          %v2619 = vunpack.c.l.b16 %v2554
          %v2620 = vunpack.c.l.b16 %v2555
          %v2621 = vunpack.c.l.b16 %v2556
          %v2622 = vunpack.c.l.b16 %v2557
          %v2623 = vunpack.c.l.b16 %v2558
          %v2624 = vunpack.c.l.b16 %v2559
          %v2625 = vunpack.c.l.b16 %v2560
          %v2626 = vunpack.c.l.b16 %v2561
          %v2627 = vunpack.c.l.b16 %v2562
          %v2628 = vunpack.c.l.b16 %v2563
          %v2629 = vunpack.c.l.b16 %v2564
          %v2630 = vunpack.c.l.b16 %v2565
          %v2631 = vunpack.c.l.b16 %v2566
          %v2632 = vunpack.c.l.b16 %v2567
          %v2633 = vunpack.c.l.b16 %v2568
          %v2634 = vunpack.c.l.b16 %v2569
          %v2635 = vunpack.c.l.b16 %v2570
          %v2636 = vunpack.c.l.b16 %v2571
          %v2637 = vunpack.c.l.b16 %v2572
          %v2638 = vunpack.c.l.b16 %v2573
          %v2639 = vunpack.c.l.b16 %v2574
          %v2640 = vunpack.c.l.b16 %v2575
          %v2641 = vunpack.c.l.b16 %v2576
          %v2642 = vpack.c.b16 %v2611, %v2610
          %v2643 = vpack.c.b16 %v2613, %v2612
          %v2644 = vpack.c.b16 %v2615, %v2614
          %v2645 = vpack.c.b16 %v2617, %v2616
          %v2646 = vpack.c.b16 %v2619, %v2618
          %v2647 = vpack.c.b16 %v2621, %v2620
          %v2648 = vpack.c.b16 %v2623, %v2622
          %v2649 = vpack.c.b16 %v2625, %v2624
          %v2650 = vpack.c.b16 %v2627, %v2626
          %v2651 = vpack.c.b16 %v2629, %v2628
          %v2652 = vpack.c.b16 %v2631, %v2630
          %v2653 = vpack.c.b16 %v2633, %v2632
          %v2654 = vpack.c.b16 %v2635, %v2634
          %v2655 = vpack.c.b16 %v2637, %v2636
          %v2656 = vpack.c.b16 %v2639, %v2638
          %v2657 = vpack.c.b16 %v2641, %v2640
          %2674 = vmatprep.subr.bf16.mxu0 0
          %2675 = vmatpush1.bf16.msra.mxu0 %v2642
          %2676 = vmatprep.subr.bf16.mxu0 0
          %2677 = vmatpush1.bf16.msra.mxu0 %v2643
          %2678 = vmatprep.subr.bf16.mxu0 0
          %2679 = vmatpush1.bf16.msra.mxu0 %v2644
          %2680 = vmatprep.subr.bf16.mxu0 0
          %2681 = vmatpush1.bf16.msra.mxu0 %v2645
          %2682 = vmatprep.subr.bf16.mxu0 0
          %2683 = vmatpush1.bf16.msra.mxu0 %v2646
          %2684 = vmatprep.subr.bf16.mxu0 0
          %2685 = vmatpush1.bf16.msra.mxu0 %v2647
          %2686 = vmatprep.subr.bf16.mxu0 0
          %2687 = vmatpush1.bf16.msra.mxu0 %v2648
          %2688 = vmatprep.subr.bf16.mxu0 0
          %2689 = vmatpush1.bf16.msra.mxu0 %v2649
          %2690 = vmatprep.subr.bf16.mxu0 0
          %2691 = vmatpush1.bf16.msra.mxu0 %v2650
          %2692 = vmatprep.subr.bf16.mxu0 0
          %2693 = vmatpush1.bf16.msra.mxu0 %v2651
          %2694 = vmatprep.subr.bf16.mxu0 0
          %2695 = vmatpush1.bf16.msra.mxu0 %v2652
          %2696 = vmatprep.subr.bf16.mxu0 0
          %2697 = vmatpush1.bf16.msra.mxu0 %v2653
          %2698 = vmatprep.subr.bf16.mxu0 0
          %2699 = vmatpush1.bf16.msra.mxu0 %v2654
          %2700 = vmatprep.subr.bf16.mxu0 0
          %2701 = vmatpush1.bf16.msra.mxu0 %v2655
          %2702 = vmatprep.subr.bf16.mxu0 0
          %2703 = vmatpush1.bf16.msra.mxu0 %v2656
          %2704 = vmatprep.subr.bf16.mxu0 0
          %2705 = vmatpush1.bf16.msra.mxu0 %v2657
          %2706 = vmatprep.mubr.bf16.mxu0 %v2544
          %2707 = vmatmul.mubr.bf16.gmra.mrb[0].mxu0 %v2543
          %v2708 = vpop.f32.mrb[0].mxu0
          %v2709 = vadd.f32 %v2577, %v2708
          %v2710 = vpop.f32.mrb[0].mxu0
          %v2711 = vpop.f32.mrb[0].mxu0
          %v2712 = vpop.f32.mrb[0].mxu0
          %2713 = vdwg.mxu0
          %vm2714 = vcmask 8192
          %2715 = vst.msk [vmem:[%s796] sm:$0x1] %vm2714, %v2709
        $region108: #{bert_base_forward.1} parent=99 // pred_fallthru
          _
        %s2716 = sand.u32 %s544, 1
        %s2717 = scalar_lea.sflag [#allocation4], %s2716
        %s2718 = sand.u32 %s544, 1
        %s2719 = scalar_lea.vmem [#allocation3], %s2718
        // Predicated region
        $region109: #{bert_base_forward.1} parent=99 // pred_check
          %p2720 = pneg %p554
        $region110: #{bert_base_forward.1} parent=99 // pred_check_branch
          %2722 = sbr.rel (%p2720) target = $region112
        $region111: #{bert_base_forward.1} parent=99 // pred_region
          %s2724 = ssub.s32 16, 16
          %2725 = vsyncadd %s2717, %s2724
          %s2726 = smul.addr %s38, 16
          %s2727 = scalar_lea.hbm %s20, %s2726
          %s2729 = sshll.u32 %s2719, 4
          %s2730 = int_to_ptr.vmem [resolvable:$true] %s2729
          %2732 = dma.vmem_to_hbm [thread:$0]  %s2730, 16, %s2727, %s2717
        $region112: #{bert_base_forward.1} parent=99 // pred_fallthru
          _
      $region100: #{bert_base_forward.1} parent=5 // pred_fallthru
        _
      %p2733 = scmp.le.s32.totalorder 2, %s29
      // Predicated region
      $region113: #{bert_base_forward.1} parent=5 // pred_check
        %p2734 = pneg %p2733
      $region114: #{bert_base_forward.1} parent=5 // pred_check_branch
        %2736 = sbr.rel (%p2734) target = $region116
      $region115: #{bert_base_forward.1} parent=5 // pred_region
        %s2737 = ssub.s32 %s29, 2
        // Predicated region
        $region117: #{bert_base_forward.1} parent=115 // pred_check
          %p2738 = pneg %p560
        $region118: #{bert_base_forward.1} parent=115 // pred_check_branch
          %2740 = sbr.rel (%p2738) target = $region120
        $region119: #{bert_base_forward.1} parent=115 // pred_region
          %s2741 = sand.u32 %s545, 1
          %s2742 = scalar_lea.sflag [#allocation4], %s2741
          %s2743 = sand.u32 %s545, 1
          %s2744 = scalar_lea.vmem [#allocation3], %s2743
          %2745 = dma.done %s2742, 16
        $region120: #{bert_base_forward.1} parent=115 // pred_fallthru
          _
      $region116: #{bert_base_forward.1} parent=5 // pred_fallthru
        _
    $region6: #{bert_base_forward.1} parent=1 // loop_footer
      %s33 = sadd.s32 1, %s29
    $region7: #{bert_base_forward.1} parent=1 // loop_footer_branch
      %28 = sbr.rel target = $region3
    $region8: #{bert_base_forward.1} parent=1 // loop_exit
      _
    %2746 = vsyncpa [#allocation4], 1
    %s2747 = scalar_lea.sflag [#allocation4], 1
    %2748 = vsyncpa %s2747, 1

</llo_original>
